<compile_context>
chip_gen: v6e
topology: v6e:2x2x1
jax: 0.10.0
libtpu: 0.0.40
codegen_flags: <defaults>
</compile_context>

<pallas_src>
import functools

import jax
import jax.numpy as jnp
from jax.experimental import pallas as pl
from jax.experimental.pallas import tpu as pltpu


# ----------------------------------------------------------------------------
# Fused kernel: encoder (once) + unrolled GRU recurrence + batched aug_type MLP.
# ----------------------------------------------------------------------------
def augmenter_kernel(x_ref, ap_ref,
                     w0_ref, b0_ref, w1_ref, b1_ref, w2_ref, b2_ref,
                     wi_ref, bi_ref, wh_ref, bh_ref,
                     wm1_ref, bm1_ref, wm2_ref, bm2_ref,
                     logp_ref,
                     hs_scr):
    T, H = hs_scr.shape   # (max_num_aug, hid_dim) — static inside the kernel

    # ---- GIN-style encoder: loop-invariant (graph is never mutated) -> once ----
    a = ap_ref[...]       # A + I  (precomputed in the wrapper)
    h = x_ref[...]

    def gin_layer(h, w_ref, b_ref):
        agg = jnp.dot(a, h, preferred_element_type=jnp.float32)
        return jnp.maximum(
            jnp.dot(agg, w_ref[...], preferred_element_type=jnp.float32)
            + b_ref[...], 0.0)

    h = gin_layer(h, w0_ref, b0_ref)
    h = gin_layer(h, w1_ref, b1_ref)
    node_emb = gin_layer(h, w2_ref, b2_ref)
    # TODO(synk): node_emb would feed aug_trans_heads (NodeFM/NodeDrop/EdgePer),
    # which are not defined in the provided source; it stays VMEM-resident only.
    xv = jnp.mean(node_emb, axis=0, keepdims=True)   # virtual-node readout (1, H)

    # ---- GRU recurrence (PyTorch semantics, seq_len = batch = 1) ----
    # xv is loop-invariant, so the input-gate matmul is hoisted out of the loop.
    gi = jnp.dot(xv, wi_ref[...], preferred_element_type=jnp.float32) + bi_ref[...]

    hid = jnp.zeros((1, H), jnp.float32)              # rnn_hidden init
    for t in range(T):                                # statically unrolled (T small)
        gh = jnp.dot(hid, wh_ref[...], preferred_element_type=jnp.float32) \
            + bh_ref[...]
        r = jax.nn.sigmoid(gi[:, 0:H] + gh[:, 0:H])
        z = jax.nn.sigmoid(gi[:, H:2 * H] + gh[:, H:2 * H])
        n = jnp.tanh(gi[:, 2 * H:3 * H] + r * gh[:, 2 * H:3 * H])
        hid = (1.0 - z) * n + z * hid
        hs_scr[pl.ds(t, 1), :] = hid                  # stash per-step hidden state

    # ---- batched aug_type MLP over all steps: Linear -> ReLU -> Linear ----
    hs = hs_scr[...]                                  # (T, H)
    a1 = jnp.maximum(
        jnp.dot(hs, wm1_ref[...], preferred_element_type=jnp.float32)
        + bm1_ref[...], 0.0)
    logits = (jnp.dot(a1, wm2_ref[...], preferred_element_type=jnp.float32)
              + bm2_ref[...])
    # stable log_softmax(dim=-1), written once as a single lane-dense slab
    m = jnp.max(logits, axis=-1, keepdims=True)
    e = jnp.exp(logits - m)
    s = jnp.sum(e, axis=-1, keepdims=True)
    logp_ref[...] = (logits - m) - jnp.log(s)


def augmenter_forward(x, a_plus, enc, wi, bi, wh, bh, mlp, max_num_aug):
    H = wi.shape[0]
    A = mlp["w2"].shape[1]

    def full2d(shape):
        return pl.BlockSpec(shape, lambda i: (0, 0))   # whole array resident in VMEM

    # TODO(synk): if N grows large, tile the encoder over node rows instead of
    # keeping the full (N, N) adjacency VMEM-resident (first breaks on v7x 64 MiB).
    operands = (x, a_plus,
                enc["w0"], enc["b0"], enc["w1"], enc["b1"], enc["w2"], enc["b2"],
                wi, bi, wh, bh,
                mlp["w1"], mlp["b1"], mlp["w2"], mlp["b2"])

    grid_spec = pltpu.PrefetchScalarGridSpec(
        num_scalar_prefetch=0,
        grid=(1,),                                     # single invocation; loop is in-kernel
        in_specs=[full2d(op.shape) for op in operands],
        out_specs=pl.BlockSpec((max_num_aug, A), lambda i: (0, 0)),
        scratch_shapes=[pltpu.VMEM((max_num_aug, H), jnp.float32)],  # per-step hidden states
    )
    logp = pl.pallas_call(
        augmenter_kernel,
        out_shape=jax.ShapeDtypeStruct((max_num_aug, A), jnp.float32),
        grid_spec=grid_spec,
        compiler_params=pltpu.CompilerParams(
            dimension_semantics=("arbitrary",)),
    )(*operands)
    return logp


# ----------------------------------------------------------------------------
# Augmenter.augment: vectorized sampling / log-likelihood glue around the kernel.
# ----------------------------------------------------------------------------
@functools.partial(jax.jit, static_argnames=("max_num_aug",))
def augment(x, adj, params, key, max_num_aug):
    N = x.shape[0]
    a_plus = adj + jnp.eye(N, dtype=adj.dtype)

    logp = augmenter_forward(x, a_plus, params["enc"],
                             params["wi"], params["bi"],
                             params["wh"], params["bh"],
                             params["mlp"], max_num_aug)          # (max_num_aug, A)

    # Categorical(probs).sample() per step + sum of log(probs[sample]) — batched.
    aug_types = jax.random.categorical(key, logp, axis=-1)        # (max_num_aug,)
    log_likelihood = jnp.take_along_axis(
        logp, aug_types[:, None], axis=-1).sum()
    # TODO(synk): aug_trans_heads (NodeFM/NodeDrop/EdgePer) graph mutations and the
    # use_stop_aug early break are not defined in the provided source; x is unchanged.
    return x, log_likelihood


# ----------------------------------------------------------------------------
# Deterministic parameter init (+ one-time GRU weight fusion) and driver.
# ----------------------------------------------------------------------------
def init_params(key, in_dim, hid_dim, num_aug_types):
    ks = jax.random.split(key, 24)
    s = 0.1

    def mat(k, shape):
        return jax.random.normal(k, shape, jnp.float32) * s

    enc = {
        "w0": mat(ks[0], (in_dim, hid_dim)), "b0": jnp.zeros((1, hid_dim), jnp.float32),
        "w1": mat(ks[1], (hid_dim, hid_dim)), "b1": jnp.zeros((1, hid_dim), jnp.float32),
        "w2": mat(ks[2], (hid_dim, hid_dim)), "b2": jnp.zeros((1, hid_dim), jnp.float32),
    }
    gru = {
        "w_ir": mat(ks[3], (hid_dim, hid_dim)), "w_iz": mat(ks[4], (hid_dim, hid_dim)),
        "w_in": mat(ks[5], (hid_dim, hid_dim)),
        "w_hr": mat(ks[6], (hid_dim, hid_dim)), "w_hz": mat(ks[7], (hid_dim, hid_dim)),
        "w_hn": mat(ks[8], (hid_dim, hid_dim)),
        "b_ir": mat(ks[9], (1, hid_dim)), "b_iz": mat(ks[10], (1, hid_dim)),
        "b_in": mat(ks[11], (1, hid_dim)),
        "b_hr": mat(ks[12], (1, hid_dim)), "b_hz": mat(ks[13], (1, hid_dim)),
        "b_hn": mat(ks[14], (1, hid_dim)),
    }
    mlp = {
        "w1": mat(ks[15], (hid_dim, hid_dim)), "b1": jnp.zeros((1, hid_dim), jnp.float32),
        "w2": mat(ks[16], (hid_dim, num_aug_types)),
        "b2": jnp.zeros((1, num_aug_types), jnp.float32),
    }
    return {"enc": enc, "gru": gru, "mlp": mlp}


def fuse_gru_params(params):
    """One-time (outside jit) concatenation of GRU gate weights: [r | z | n]."""
    gru = params["gru"]
    wi = jnp.concatenate([gru["w_ir"], gru["w_iz"], gru["w_in"]], axis=1)  # (H, 3H)
    wh = jnp.concatenate([gru["w_hr"], gru["w_hz"], gru["w_hn"]], axis=1)  # (H, 3H)
    bi = jnp.concatenate([gru["b_ir"], gru["b_iz"], gru["b_in"]], axis=1)  # (1, 3H)
    bh = jnp.concatenate([gru["b_hr"], gru["b_hz"], gru["b_hn"]], axis=1)  # (1, 3H)
    return {"enc": params["enc"], "mlp": params["mlp"],
            "wi": wi, "wh": wh, "bi": bi, "bh": bh}


if __name__ == "__main__":
    N = 16             # nodes in the (single) graph
    IN_DIM = 32        # node feature dim
    HID_DIM = 32       # hidden / rnn dim
    NUM_AUG_TYPES = 3  # {'node_fm', 'node_drop', 'edge_per'}
    MAX_NUM_AUG = 4    # augmentation loop length (use_stop_aug=False -> fixed length)

    root = jax.random.PRNGKey(0)
    k_param, k_x, k_adj, k_sample = jax.random.split(root, 4)

    params = fuse_gru_params(init_params(k_param, IN_DIM, HID_DIM, NUM_AUG_TYPES))

    # deterministic small graph: node features + random symmetric adjacency
    x = jax.random.normal(k_x, (N, IN_DIM), jnp.float32)
    a = (jax.random.uniform(k_adj, (N, N)) < 0.3).astype(jnp.float32)
    adj = jnp.maximum(a, a.T) * (1.0 - jnp.eye(N, dtype=jnp.float32))

    new_x, log_likelihood = augment(x, adj, params, k_sample, MAX_NUM_AUG)
    jax.block_until_ready((new_x, log_likelihood))
    print("KERNEL_OK")
</pallas_src>

<mosaic_0001>
module attributes {stable_mosaic.version = 11 : i64} {
  func.func @augmenter_kernel(%arg0: i32, %arg1: memref<16x32xf32, #tpu.memory_space<vmem>>, %arg2: memref<16x16xf32, #tpu.memory_space<vmem>>, %arg3: memref<32x32xf32, #tpu.memory_space<vmem>>, %arg4: memref<1x32xf32, #tpu.memory_space<vmem>>, %arg5: memref<32x32xf32, #tpu.memory_space<vmem>>, %arg6: memref<1x32xf32, #tpu.memory_space<vmem>>, %arg7: memref<32x32xf32, #tpu.memory_space<vmem>>, %arg8: memref<1x32xf32, #tpu.memory_space<vmem>>, %arg9: memref<32x96xf32, #tpu.memory_space<vmem>>, %arg10: memref<1x96xf32, #tpu.memory_space<vmem>>, %arg11: memref<32x96xf32, #tpu.memory_space<vmem>>, %arg12: memref<1x96xf32, #tpu.memory_space<vmem>>, %arg13: memref<32x32xf32, #tpu.memory_space<vmem>>, %arg14: memref<1x32xf32, #tpu.memory_space<vmem>>, %arg15: memref<32x3xf32, #tpu.memory_space<vmem>>, %arg16: memref<1x3xf32, #tpu.memory_space<vmem>>, %arg17: memref<4x3xf32, #tpu.memory_space<vmem>>, %arg18: memref<4x32xf32, #tpu.memory_space<vmem>>) attributes {dimension_semantics = [#tpu.dimension_semantics<arbitrary>], iteration_bounds = array<i64: 1>, scalar_prefetch = 0 : i64, scratch_operands = 1 : i64, tpu.core_type = #tpu.core_type<tc>, window_params = [{pipeline_mode = #tpu.pipeline_mode<synchronous>, transform_indices = @transform_0, window_bounds = array<i64: 16, 32>}, {pipeline_mode = #tpu.pipeline_mode<synchronous>, transform_indices = @transform_1, window_bounds = array<i64: 16, 16>}, {pipeline_mode = #tpu.pipeline_mode<synchronous>, transform_indices = @transform_2, window_bounds = array<i64: 32, 32>}, {pipeline_mode = #tpu.pipeline_mode<synchronous>, transform_indices = @transform_3, window_bounds = array<i64: 1, 32>}, {pipeline_mode = #tpu.pipeline_mode<synchronous>, transform_indices = @transform_4, window_bounds = array<i64: 32, 32>}, {pipeline_mode = #tpu.pipeline_mode<synchronous>, transform_indices = @transform_5, window_bounds = array<i64: 1, 32>}, {pipeline_mode = #tpu.pipeline_mode<synchronous>, transform_indices = @transform_6, window_bounds = array<i64: 32, 32>}, {pipeline_mode = #tpu.pipeline_mode<synchronous>, transform_indices = @transform_7, window_bounds = array<i64: 1, 32>}, {pipeline_mode = #tpu.pipeline_mode<synchronous>, transform_indices = @transform_8, window_bounds = array<i64: 32, 96>}, {pipeline_mode = #tpu.pipeline_mode<synchronous>, transform_indices = @transform_9, window_bounds = array<i64: 1, 96>}, {pipeline_mode = #tpu.pipeline_mode<synchronous>, transform_indices = @transform_10, window_bounds = array<i64: 32, 96>}, {pipeline_mode = #tpu.pipeline_mode<synchronous>, transform_indices = @transform_11, window_bounds = array<i64: 1, 96>}, {pipeline_mode = #tpu.pipeline_mode<synchronous>, transform_indices = @transform_12, window_bounds = array<i64: 32, 32>}, {pipeline_mode = #tpu.pipeline_mode<synchronous>, transform_indices = @transform_13, window_bounds = array<i64: 1, 32>}, {pipeline_mode = #tpu.pipeline_mode<synchronous>, transform_indices = @transform_14, window_bounds = array<i64: 32, 3>}, {pipeline_mode = #tpu.pipeline_mode<synchronous>, transform_indices = @transform_15, window_bounds = array<i64: 1, 3>}, {pipeline_mode = #tpu.pipeline_mode<synchronous>, transform_indices = @transform_16, window_bounds = array<i64: 4, 3>}]} {
    %c0 = arith.constant 0 : index
    %c0_0 = arith.constant 0 : index
    %0 = vector.load %arg2[%c0, %c0_0] : memref<16x16xf32, #tpu.memory_space<vmem>>, vector<16x16xf32>
    %c0_1 = arith.constant 0 : index
    %c0_2 = arith.constant 0 : index
    %1 = vector.load %arg1[%c0_1, %c0_2] : memref<16x32xf32, #tpu.memory_space<vmem>>, vector<16x32xf32>
    %cst = arith.constant dense<0.000000e+00> : vector<16x32xf32>
    %2 = tpu.matmul %0, %1, %cst {dimension_numbers = #tpu.dot_dimension_numbers<[1], [0], [0], [1], [0, 0, 1, 1], [], []>} : vector<16x16xf32>, vector<16x32xf32>, vector<16x32xf32> -> vector<16x32xf32>
    %c0_3 = arith.constant 0 : index
    %c0_4 = arith.constant 0 : index
    %3 = vector.load %arg3[%c0_3, %c0_4] : memref<32x32xf32, #tpu.memory_space<vmem>>, vector<32x32xf32>
    %cst_5 = arith.constant dense<0.000000e+00> : vector<16x32xf32>
    %4 = tpu.matmul %2, %3, %cst_5 {dimension_numbers = #tpu.dot_dimension_numbers<[1], [0], [0], [1], [0, 0, 1, 1], [], []>} : vector<16x32xf32>, vector<32x32xf32>, vector<16x32xf32> -> vector<16x32xf32>
    %c0_6 = arith.constant 0 : index
    %c0_7 = arith.constant 0 : index
    %5 = vector.load %arg4[%c0_6, %c0_7] : memref<1x32xf32, #tpu.memory_space<vmem>>, vector<1x32xf32>
    %6 = vector.broadcast %5 : vector<1x32xf32> to vector<16x32xf32>
    %7 = arith.addf %4, %6 : vector<16x32xf32>
    %cst_8 = arith.constant 0.000000e+00 : f32
    %8 = vector.broadcast %cst_8 : f32 to vector<16x32xf32>
    %9 = arith.maximumf %7, %8 : vector<16x32xf32>
    %cst_9 = arith.constant dense<0.000000e+00> : vector<16x32xf32>
    %10 = tpu.matmul %0, %9, %cst_9 {dimension_numbers = #tpu.dot_dimension_numbers<[1], [0], [0], [1], [0, 0, 1, 1], [], []>} : vector<16x16xf32>, vector<16x32xf32>, vector<16x32xf32> -> vector<16x32xf32>
    %c0_10 = arith.constant 0 : index
    %c0_11 = arith.constant 0 : index
    %11 = vector.load %arg5[%c0_10, %c0_11] : memref<32x32xf32, #tpu.memory_space<vmem>>, vector<32x32xf32>
    %cst_12 = arith.constant dense<0.000000e+00> : vector<16x32xf32>
    %12 = tpu.matmul %10, %11, %cst_12 {dimension_numbers = #tpu.dot_dimension_numbers<[1], [0], [0], [1], [0, 0, 1, 1], [], []>} : vector<16x32xf32>, vector<32x32xf32>, vector<16x32xf32> -> vector<16x32xf32>
    %c0_13 = arith.constant 0 : index
    %c0_14 = arith.constant 0 : index
    %13 = vector.load %arg6[%c0_13, %c0_14] : memref<1x32xf32, #tpu.memory_space<vmem>>, vector<1x32xf32>
    %14 = vector.broadcast %13 : vector<1x32xf32> to vector<16x32xf32>
    %15 = arith.addf %12, %14 : vector<16x32xf32>
    %cst_15 = arith.constant 0.000000e+00 : f32
    %16 = vector.broadcast %cst_15 : f32 to vector<16x32xf32>
    %17 = arith.maximumf %15, %16 : vector<16x32xf32>
    %cst_16 = arith.constant dense<0.000000e+00> : vector<16x32xf32>
    %18 = tpu.matmul %0, %17, %cst_16 {dimension_numbers = #tpu.dot_dimension_numbers<[1], [0], [0], [1], [0, 0, 1, 1], [], []>} : vector<16x16xf32>, vector<16x32xf32>, vector<16x32xf32> -> vector<16x32xf32>
    %c0_17 = arith.constant 0 : index
    %c0_18 = arith.constant 0 : index
    %19 = vector.load %arg7[%c0_17, %c0_18] : memref<32x32xf32, #tpu.memory_space<vmem>>, vector<32x32xf32>
    %cst_19 = arith.constant dense<0.000000e+00> : vector<16x32xf32>
    %20 = tpu.matmul %18, %19, %cst_19 {dimension_numbers = #tpu.dot_dimension_numbers<[1], [0], [0], [1], [0, 0, 1, 1], [], []>} : vector<16x32xf32>, vector<32x32xf32>, vector<16x32xf32> -> vector<16x32xf32>
    %c0_20 = arith.constant 0 : index
    %c0_21 = arith.constant 0 : index
    %21 = vector.load %arg8[%c0_20, %c0_21] : memref<1x32xf32, #tpu.memory_space<vmem>>, vector<1x32xf32>
    %22 = vector.broadcast %21 : vector<1x32xf32> to vector<16x32xf32>
    %23 = arith.addf %20, %22 : vector<16x32xf32>
    %cst_22 = arith.constant 0.000000e+00 : f32
    %24 = vector.broadcast %cst_22 : f32 to vector<16x32xf32>
    %25 = arith.maximumf %23, %24 : vector<16x32xf32>
    %cst_23 = arith.constant dense<0.000000e+00> : vector<32xf32>
    %26 = vector.multi_reduction <add>, %25, %cst_23 [0] : vector<16x32xf32> to vector<32xf32>
    %27 = vector.shape_cast %26 : vector<32xf32> to vector<1x32xf32>
    %cst_24 = arith.constant 1.600000e+01 : f32
    %28 = vector.broadcast %cst_24 : f32 to vector<1x32xf32>
    %29 = arith.divf %27, %28 : vector<1x32xf32>
    %c0_25 = arith.constant 0 : index
    %c0_26 = arith.constant 0 : index
    %30 = vector.load %arg9[%c0_25, %c0_26] : memref<32x96xf32, #tpu.memory_space<vmem>>, vector<32x96xf32>
    %cst_27 = arith.constant dense<0.000000e+00> : vector<1x96xf32>
    %31 = tpu.matmul %29, %30, %cst_27 {dimension_numbers = #tpu.dot_dimension_numbers<[1], [0], [0], [1], [0, 0, 1, 1], [], []>} : vector<1x32xf32>, vector<32x96xf32>, vector<1x96xf32> -> vector<1x96xf32>
    %c0_28 = arith.constant 0 : index
    %c0_29 = arith.constant 0 : index
    %32 = vector.load %arg10[%c0_28, %c0_29] : memref<1x96xf32, #tpu.memory_space<vmem>>, vector<1x96xf32>
    %33 = arith.addf %31, %32 : vector<1x96xf32>
    %cst_30 = arith.constant 0.000000e+00 : f32
    %34 = vector.broadcast %cst_30 : f32 to vector<1x32xf32>
    %c0_31 = arith.constant 0 : index
    %c0_32 = arith.constant 0 : index
    %35 = vector.load %arg11[%c0_31, %c0_32] : memref<32x96xf32, #tpu.memory_space<vmem>>, vector<32x96xf32>
    %cst_33 = arith.constant dense<0.000000e+00> : vector<1x96xf32>
    %36 = tpu.matmul %34, %35, %cst_33 {dimension_numbers = #tpu.dot_dimension_numbers<[1], [0], [0], [1], [0, 0, 1, 1], [], []>} : vector<1x32xf32>, vector<32x96xf32>, vector<1x96xf32> -> vector<1x96xf32>
    %c0_34 = arith.constant 0 : index
    %c0_35 = arith.constant 0 : index
    %37 = vector.load %arg12[%c0_34, %c0_35] : memref<1x96xf32, #tpu.memory_space<vmem>>, vector<1x96xf32>
    %38 = arith.addf %36, %37 : vector<1x96xf32>
    %39 = vector.extract_strided_slice %33 {offsets = [0, 0], sizes = [1, 32], strides = [1, 1]} : vector<1x96xf32> to vector<1x32xf32>
    %40 = vector.extract_strided_slice %38 {offsets = [0, 0], sizes = [1, 32], strides = [1, 1]} : vector<1x96xf32> to vector<1x32xf32>
    %41 = arith.addf %39, %40 : vector<1x32xf32>
    %42 = arith.negf %41 : vector<1x32xf32>
    %43 = math.exp %42 : vector<1x32xf32>
    %cst_36 = arith.constant 1.000000e+00 : f32
    %44 = vector.broadcast %cst_36 : f32 to vector<1x32xf32>
    %45 = arith.addf %44, %43 : vector<1x32xf32>
    %46 = arith.divf %44, %45 : vector<1x32xf32>
    %47 = vector.extract_strided_slice %33 {offsets = [0, 32], sizes = [1, 32], strides = [1, 1]} : vector<1x96xf32> to vector<1x32xf32>
    %48 = vector.extract_strided_slice %38 {offsets = [0, 32], sizes = [1, 32], strides = [1, 1]} : vector<1x96xf32> to vector<1x32xf32>
    %49 = arith.addf %47, %48 : vector<1x32xf32>
    %50 = arith.negf %49 : vector<1x32xf32>
    %51 = math.exp %50 : vector<1x32xf32>
    %cst_37 = arith.constant 1.000000e+00 : f32
    %52 = vector.broadcast %cst_37 : f32 to vector<1x32xf32>
    %53 = arith.addf %52, %51 : vector<1x32xf32>
    %54 = arith.divf %52, %53 : vector<1x32xf32>
    %55 = vector.extract_strided_slice %33 {offsets = [0, 64], sizes = [1, 32], strides = [1, 1]} : vector<1x96xf32> to vector<1x32xf32>
    %56 = vector.extract_strided_slice %38 {offsets = [0, 64], sizes = [1, 32], strides = [1, 1]} : vector<1x96xf32> to vector<1x32xf32>
    %57 = arith.mulf %46, %56 : vector<1x32xf32>
    %58 = arith.addf %55, %57 : vector<1x32xf32>
    %59 = math.tanh %58 : vector<1x32xf32>
    %cst_38 = arith.constant 1.000000e+00 : f32
    %60 = vector.broadcast %cst_38 : f32 to vector<1x32xf32>
    %61 = arith.subf %60, %54 : vector<1x32xf32>
    %62 = arith.mulf %61, %59 : vector<1x32xf32>
    %63 = arith.mulf %54, %34 : vector<1x32xf32>
    %64 = arith.addf %62, %63 : vector<1x32xf32>
    %c0_39 = arith.constant 0 : index
    %c0_40 = arith.constant 0 : index
    %65 = vector.load %arg18[%c0_39, %c0_40] : memref<4x32xf32, #tpu.memory_space<vmem>>, vector<1x32xf32>
    tpu.vector_store %arg18[%c0_39, %c0_40], %64 {strides = array<i32>} : memref<4x32xf32, #tpu.memory_space<vmem>>, vector<1x32xf32>,
    %c0_41 = arith.constant 0 : index
    %c0_42 = arith.constant 0 : index
    %66 = vector.load %arg11[%c0_41, %c0_42] : memref<32x96xf32, #tpu.memory_space<vmem>>, vector<32x96xf32>
    %cst_43 = arith.constant dense<0.000000e+00> : vector<1x96xf32>
    %67 = tpu.matmul %64, %66, %cst_43 {dimension_numbers = #tpu.dot_dimension_numbers<[1], [0], [0], [1], [0, 0, 1, 1], [], []>} : vector<1x32xf32>, vector<32x96xf32>, vector<1x96xf32> -> vector<1x96xf32>
    %c0_44 = arith.constant 0 : index
    %c0_45 = arith.constant 0 : index
    %68 = vector.load %arg12[%c0_44, %c0_45] : memref<1x96xf32, #tpu.memory_space<vmem>>, vector<1x96xf32>
    %69 = arith.addf %67, %68 : vector<1x96xf32>
    %70 = vector.extract_strided_slice %33 {offsets = [0, 0], sizes = [1, 32], strides = [1, 1]} : vector<1x96xf32> to vector<1x32xf32>
    %71 = vector.extract_strided_slice %69 {offsets = [0, 0], sizes = [1, 32], strides = [1, 1]} : vector<1x96xf32> to vector<1x32xf32>
    %72 = arith.addf %70, %71 : vector<1x32xf32>
    %73 = arith.negf %72 : vector<1x32xf32>
    %74 = math.exp %73 : vector<1x32xf32>
    %cst_46 = arith.constant 1.000000e+00 : f32
    %75 = vector.broadcast %cst_46 : f32 to vector<1x32xf32>
    %76 = arith.addf %75, %74 : vector<1x32xf32>
    %77 = arith.divf %75, %76 : vector<1x32xf32>
    %78 = vector.extract_strided_slice %33 {offsets = [0, 32], sizes = [1, 32], strides = [1, 1]} : vector<1x96xf32> to vector<1x32xf32>
    %79 = vector.extract_strided_slice %69 {offsets = [0, 32], sizes = [1, 32], strides = [1, 1]} : vector<1x96xf32> to vector<1x32xf32>
    %80 = arith.addf %78, %79 : vector<1x32xf32>
    %81 = arith.negf %80 : vector<1x32xf32>
    %82 = math.exp %81 : vector<1x32xf32>
    %cst_47 = arith.constant 1.000000e+00 : f32
    %83 = vector.broadcast %cst_47 : f32 to vector<1x32xf32>
    %84 = arith.addf %83, %82 : vector<1x32xf32>
    %85 = arith.divf %83, %84 : vector<1x32xf32>
    %86 = vector.extract_strided_slice %33 {offsets = [0, 64], sizes = [1, 32], strides = [1, 1]} : vector<1x96xf32> to vector<1x32xf32>
    %87 = vector.extract_strided_slice %69 {offsets = [0, 64], sizes = [1, 32], strides = [1, 1]} : vector<1x96xf32> to vector<1x32xf32>
    %88 = arith.mulf %77, %87 : vector<1x32xf32>
    %89 = arith.addf %86, %88 : vector<1x32xf32>
    %90 = math.tanh %89 : vector<1x32xf32>
    %cst_48 = arith.constant 1.000000e+00 : f32
    %91 = vector.broadcast %cst_48 : f32 to vector<1x32xf32>
    %92 = arith.subf %91, %85 : vector<1x32xf32>
    %93 = arith.mulf %92, %90 : vector<1x32xf32>
    %94 = arith.mulf %85, %64 : vector<1x32xf32>
    %95 = arith.addf %93, %94 : vector<1x32xf32>
    %c1 = arith.constant 1 : index
    %c0_49 = arith.constant 0 : index
    %96 = vector.load %arg18[%c1, %c0_49] : memref<4x32xf32, #tpu.memory_space<vmem>>, vector<1x32xf32>
    tpu.vector_store %arg18[%c1, %c0_49], %95 {strides = array<i32>} : memref<4x32xf32, #tpu.memory_space<vmem>>, vector<1x32xf32>,
    %c0_50 = arith.constant 0 : index
    %c0_51 = arith.constant 0 : index
    %97 = vector.load %arg11[%c0_50, %c0_51] : memref<32x96xf32, #tpu.memory_space<vmem>>, vector<32x96xf32>
    %cst_52 = arith.constant dense<0.000000e+00> : vector<1x96xf32>
    %98 = tpu.matmul %95, %97, %cst_52 {dimension_numbers = #tpu.dot_dimension_numbers<[1], [0], [0], [1], [0, 0, 1, 1], [], []>} : vector<1x32xf32>, vector<32x96xf32>, vector<1x96xf32> -> vector<1x96xf32>
    %c0_53 = arith.constant 0 : index
    %c0_54 = arith.constant 0 : index
    %99 = vector.load %arg12[%c0_53, %c0_54] : memref<1x96xf32, #tpu.memory_space<vmem>>, vector<1x96xf32>
    %100 = arith.addf %98, %99 : vector<1x96xf32>
    %101 = vector.extract_strided_slice %33 {offsets = [0, 0], sizes = [1, 32], strides = [1, 1]} : vector<1x96xf32> to vector<1x32xf32>
    %102 = vector.extract_strided_slice %100 {offsets = [0, 0], sizes = [1, 32], strides = [1, 1]} : vector<1x96xf32> to vector<1x32xf32>
    %103 = arith.addf %101, %102 : vector<1x32xf32>
    %104 = arith.negf %103 : vector<1x32xf32>
    %105 = math.exp %104 : vector<1x32xf32>
    %cst_55 = arith.constant 1.000000e+00 : f32
    %106 = vector.broadcast %cst_55 : f32 to vector<1x32xf32>
    %107 = arith.addf %106, %105 : vector<1x32xf32>
    %108 = arith.divf %106, %107 : vector<1x32xf32>
    %109 = vector.extract_strided_slice %33 {offsets = [0, 32], sizes = [1, 32], strides = [1, 1]} : vector<1x96xf32> to vector<1x32xf32>
    %110 = vector.extract_strided_slice %100 {offsets = [0, 32], sizes = [1, 32], strides = [1, 1]} : vector<1x96xf32> to vector<1x32xf32>
    %111 = arith.addf %109, %110 : vector<1x32xf32>
    %112 = arith.negf %111 : vector<1x32xf32>
    %113 = math.exp %112 : vector<1x32xf32>
    %cst_56 = arith.constant 1.000000e+00 : f32
    %114 = vector.broadcast %cst_56 : f32 to vector<1x32xf32>
    %115 = arith.addf %114, %113 : vector<1x32xf32>
    %116 = arith.divf %114, %115 : vector<1x32xf32>
    %117 = vector.extract_strided_slice %33 {offsets = [0, 64], sizes = [1, 32], strides = [1, 1]} : vector<1x96xf32> to vector<1x32xf32>
    %118 = vector.extract_strided_slice %100 {offsets = [0, 64], sizes = [1, 32], strides = [1, 1]} : vector<1x96xf32> to vector<1x32xf32>
    %119 = arith.mulf %108, %118 : vector<1x32xf32>
    %120 = arith.addf %117, %119 : vector<1x32xf32>
    %121 = math.tanh %120 : vector<1x32xf32>
    %cst_57 = arith.constant 1.000000e+00 : f32
    %122 = vector.broadcast %cst_57 : f32 to vector<1x32xf32>
    %123 = arith.subf %122, %116 : vector<1x32xf32>
    %124 = arith.mulf %123, %121 : vector<1x32xf32>
    %125 = arith.mulf %116, %95 : vector<1x32xf32>
    %126 = arith.addf %124, %125 : vector<1x32xf32>
    %c2 = arith.constant 2 : index
    %c0_58 = arith.constant 0 : index
    %127 = vector.load %arg18[%c2, %c0_58] : memref<4x32xf32, #tpu.memory_space<vmem>>, vector<1x32xf32>
    tpu.vector_store %arg18[%c2, %c0_58], %126 {strides = array<i32>} : memref<4x32xf32, #tpu.memory_space<vmem>>, vector<1x32xf32>,
    %c0_59 = arith.constant 0 : index
    %c0_60 = arith.constant 0 : index
    %128 = vector.load %arg11[%c0_59, %c0_60] : memref<32x96xf32, #tpu.memory_space<vmem>>, vector<32x96xf32>
    %cst_61 = arith.constant dense<0.000000e+00> : vector<1x96xf32>
    %129 = tpu.matmul %126, %128, %cst_61 {dimension_numbers = #tpu.dot_dimension_numbers<[1], [0], [0], [1], [0, 0, 1, 1], [], []>} : vector<1x32xf32>, vector<32x96xf32>, vector<1x96xf32> -> vector<1x96xf32>
    %c0_62 = arith.constant 0 : index
    %c0_63 = arith.constant 0 : index
    %130 = vector.load %arg12[%c0_62, %c0_63] : memref<1x96xf32, #tpu.memory_space<vmem>>, vector<1x96xf32>
    %131 = arith.addf %129, %130 : vector<1x96xf32>
    %132 = vector.extract_strided_slice %33 {offsets = [0, 0], sizes = [1, 32], strides = [1, 1]} : vector<1x96xf32> to vector<1x32xf32>
    %133 = vector.extract_strided_slice %131 {offsets = [0, 0], sizes = [1, 32], strides = [1, 1]} : vector<1x96xf32> to vector<1x32xf32>
    %134 = arith.addf %132, %133 : vector<1x32xf32>
    %135 = arith.negf %134 : vector<1x32xf32>
    %136 = math.exp %135 : vector<1x32xf32>
    %cst_64 = arith.constant 1.000000e+00 : f32
    %137 = vector.broadcast %cst_64 : f32 to vector<1x32xf32>
    %138 = arith.addf %137, %136 : vector<1x32xf32>
    %139 = arith.divf %137, %138 : vector<1x32xf32>
    %140 = vector.extract_strided_slice %33 {offsets = [0, 32], sizes = [1, 32], strides = [1, 1]} : vector<1x96xf32> to vector<1x32xf32>
    %141 = vector.extract_strided_slice %131 {offsets = [0, 32], sizes = [1, 32], strides = [1, 1]} : vector<1x96xf32> to vector<1x32xf32>
    %142 = arith.addf %140, %141 : vector<1x32xf32>
    %143 = arith.negf %142 : vector<1x32xf32>
    %144 = math.exp %143 : vector<1x32xf32>
    %cst_65 = arith.constant 1.000000e+00 : f32
    %145 = vector.broadcast %cst_65 : f32 to vector<1x32xf32>
    %146 = arith.addf %145, %144 : vector<1x32xf32>
    %147 = arith.divf %145, %146 : vector<1x32xf32>
    %148 = vector.extract_strided_slice %33 {offsets = [0, 64], sizes = [1, 32], strides = [1, 1]} : vector<1x96xf32> to vector<1x32xf32>
    %149 = vector.extract_strided_slice %131 {offsets = [0, 64], sizes = [1, 32], strides = [1, 1]} : vector<1x96xf32> to vector<1x32xf32>
    %150 = arith.mulf %139, %149 : vector<1x32xf32>
    %151 = arith.addf %148, %150 : vector<1x32xf32>
    %152 = math.tanh %151 : vector<1x32xf32>
    %cst_66 = arith.constant 1.000000e+00 : f32
    %153 = vector.broadcast %cst_66 : f32 to vector<1x32xf32>
    %154 = arith.subf %153, %147 : vector<1x32xf32>
    %155 = arith.mulf %154, %152 : vector<1x32xf32>
    %156 = arith.mulf %147, %126 : vector<1x32xf32>
    %157 = arith.addf %155, %156 : vector<1x32xf32>
    %c3 = arith.constant 3 : index
    %c0_67 = arith.constant 0 : index
    %158 = vector.load %arg18[%c3, %c0_67] : memref<4x32xf32, #tpu.memory_space<vmem>>, vector<1x32xf32>
    tpu.vector_store %arg18[%c3, %c0_67], %157 {strides = array<i32>} : memref<4x32xf32, #tpu.memory_space<vmem>>, vector<1x32xf32>,
    %c0_68 = arith.constant 0 : index
    %c0_69 = arith.constant 0 : index
    %159 = vector.load %arg18[%c0_68, %c0_69] : memref<4x32xf32, #tpu.memory_space<vmem>>, vector<4x32xf32>
    %c0_70 = arith.constant 0 : index
    %c0_71 = arith.constant 0 : index
    %160 = vector.load %arg13[%c0_70, %c0_71] : memref<32x32xf32, #tpu.memory_space<vmem>>, vector<32x32xf32>
    %cst_72 = arith.constant dense<0.000000e+00> : vector<4x32xf32>
    %161 = tpu.matmul %159, %160, %cst_72 {dimension_numbers = #tpu.dot_dimension_numbers<[1], [0], [0], [1], [0, 0, 1, 1], [], []>} : vector<4x32xf32>, vector<32x32xf32>, vector<4x32xf32> -> vector<4x32xf32>
    %c0_73 = arith.constant 0 : index
    %c0_74 = arith.constant 0 : index
    %162 = vector.load %arg14[%c0_73, %c0_74] : memref<1x32xf32, #tpu.memory_space<vmem>>, vector<1x32xf32>
    %163 = vector.broadcast %162 : vector<1x32xf32> to vector<4x32xf32>
    %164 = arith.addf %161, %163 : vector<4x32xf32>
    %cst_75 = arith.constant 0.000000e+00 : f32
    %165 = vector.broadcast %cst_75 : f32 to vector<4x32xf32>
    %166 = arith.maximumf %164, %165 : vector<4x32xf32>
    %c0_76 = arith.constant 0 : index
    %c0_77 = arith.constant 0 : index
    %167 = vector.load %arg15[%c0_76, %c0_77] : memref<32x3xf32, #tpu.memory_space<vmem>>, vector<32x3xf32>
    %cst_78 = arith.constant dense<0.000000e+00> : vector<4x3xf32>
    %168 = tpu.matmul %166, %167, %cst_78 {dimension_numbers = #tpu.dot_dimension_numbers<[1], [0], [0], [1], [0, 0, 1, 1], [], []>} : vector<4x32xf32>, vector<32x3xf32>, vector<4x3xf32> -> vector<4x3xf32>
    %c0_79 = arith.constant 0 : index
    %c0_80 = arith.constant 0 : index
    %169 = vector.load %arg16[%c0_79, %c0_80] : memref<1x3xf32, #tpu.memory_space<vmem>>, vector<1x3xf32>
    %170 = vector.broadcast %169 : vector<1x3xf32> to vector<4x3xf32>
    %171 = arith.addf %168, %170 : vector<4x3xf32>
    %cst_81 = arith.constant dense<0xFF800000> : vector<4xf32>
    %172 = vector.multi_reduction <maximumf>, %171, %cst_81 [1] : vector<4x3xf32> to vector<4xf32>
    %173 = vector.shape_cast %172 : vector<4xf32> to vector<4x1xf32>
    %174 = vector.broadcast %173 : vector<4x1xf32> to vector<4x3xf32>
    %175 = arith.subf %171, %174 : vector<4x3xf32>
    %176 = math.exp %175 : vector<4x3xf32>
    %cst_82 = arith.constant dense<0.000000e+00> : vector<4xf32>
    %177 = vector.multi_reduction <add>, %176, %cst_82 [1] : vector<4x3xf32> to vector<4xf32>
    %178 = vector.shape_cast %177 : vector<4xf32> to vector<4x1xf32>
    %179 = vector.broadcast %173 : vector<4x1xf32> to vector<4x3xf32>
    %180 = arith.subf %171, %179 : vector<4x3xf32>
    %181 = math.log %178 : vector<4x1xf32>
    %182 = vector.broadcast %181 : vector<4x1xf32> to vector<4x3xf32>
    %183 = arith.subf %180, %182 : vector<4x3xf32>
    %c0_83 = arith.constant 0 : index
    %c0_84 = arith.constant 0 : index
    %184 = vector.load %arg17[%c0_83, %c0_84] : memref<4x3xf32, #tpu.memory_space<vmem>>, vector<4x3xf32>
    tpu.vector_store %arg17[%c0_83, %c0_84], %183 {strides = array<i32>} : memref<4x3xf32, #tpu.memory_space<vmem>>, vector<4x3xf32>,
    return
  }
  func.func @transform_0(%arg0: i32) -> (i32, i32) {
    %c0_i32 = arith.constant 0 : i32
    %c0_i32_0 = arith.constant 0 : i32
    %c0_i32_1 = arith.constant 0 : i32
    return %c0_i32, %c0_i32_0 : i32, i32
  }
  func.func @transform_1(%arg0: i32) -> (i32, i32) {
    %c0_i32 = arith.constant 0 : i32
    %c0_i32_0 = arith.constant 0 : i32
    %c0_i32_1 = arith.constant 0 : i32
    return %c0_i32, %c0_i32_0 : i32, i32
  }
  func.func @transform_2(%arg0: i32) -> (i32, i32) {
    %c0_i32 = arith.constant 0 : i32
    %c0_i32_0 = arith.constant 0 : i32
    %c0_i32_1 = arith.constant 0 : i32
    return %c0_i32, %c0_i32_0 : i32, i32
  }
  func.func @transform_3(%arg0: i32) -> (i32, i32) {
    %c0_i32 = arith.constant 0 : i32
    %c0_i32_0 = arith.constant 0 : i32
    %c0_i32_1 = arith.constant 0 : i32
    return %c0_i32, %c0_i32_0 : i32, i32
  }
  func.func @transform_4(%arg0: i32) -> (i32, i32) {
    %c0_i32 = arith.constant 0 : i32
    %c0_i32_0 = arith.constant 0 : i32
    %c0_i32_1 = arith.constant 0 : i32
    return %c0_i32, %c0_i32_0 : i32, i32
  }
  func.func @transform_5(%arg0: i32) -> (i32, i32) {
    %c0_i32 = arith.constant 0 : i32
    %c0_i32_0 = arith.constant 0 : i32
    %c0_i32_1 = arith.constant 0 : i32
    return %c0_i32, %c0_i32_0 : i32, i32
  }
  func.func @transform_6(%arg0: i32) -> (i32, i32) {
    %c0_i32 = arith.constant 0 : i32
    %c0_i32_0 = arith.constant 0 : i32
    %c0_i32_1 = arith.constant 0 : i32
    return %c0_i32, %c0_i32_0 : i32, i32
  }
  func.func @transform_7(%arg0: i32) -> (i32, i32) {
    %c0_i32 = arith.constant 0 : i32
    %c0_i32_0 = arith.constant 0 : i32
    %c0_i32_1 = arith.constant 0 : i32
    return %c0_i32, %c0_i32_0 : i32, i32
  }
  func.func @transform_8(%arg0: i32) -> (i32, i32) {
    %c0_i32 = arith.constant 0 : i32
    %c0_i32_0 = arith.constant 0 : i32
    %c0_i32_1 = arith.constant 0 : i32
    return %c0_i32, %c0_i32_0 : i32, i32
  }
  func.func @transform_9(%arg0: i32) -> (i32, i32) {
    %c0_i32 = arith.constant 0 : i32
    %c0_i32_0 = arith.constant 0 : i32
    %c0_i32_1 = arith.constant 0 : i32
    return %c0_i32, %c0_i32_0 : i32, i32
  }
  func.func @transform_10(%arg0: i32) -> (i32, i32) {
    %c0_i32 = arith.constant 0 : i32
    %c0_i32_0 = arith.constant 0 : i32
    %c0_i32_1 = arith.constant 0 : i32
    return %c0_i32, %c0_i32_0 : i32, i32
  }
  func.func @transform_11(%arg0: i32) -> (i32, i32) {
    %c0_i32 = arith.constant 0 : i32
    %c0_i32_0 = arith.constant 0 : i32
    %c0_i32_1 = arith.constant 0 : i32
    return %c0_i32, %c0_i32_0 : i32, i32
  }
  func.func @transform_12(%arg0: i32) -> (i32, i32) {
    %c0_i32 = arith.constant 0 : i32
    %c0_i32_0 = arith.constant 0 : i32
    %c0_i32_1 = arith.constant 0 : i32
    return %c0_i32, %c0_i32_0 : i32, i32
  }
  func.func @transform_13(%arg0: i32) -> (i32, i32) {
    %c0_i32 = arith.constant 0 : i32
    %c0_i32_0 = arith.constant 0 : i32
    %c0_i32_1 = arith.constant 0 : i32
    return %c0_i32, %c0_i32_0 : i32, i32
  }
  func.func @transform_14(%arg0: i32) -> (i32, i32) {
    %c0_i32 = arith.constant 0 : i32
    %c0_i32_0 = arith.constant 0 : i32
    %c0_i32_1 = arith.constant 0 : i32
    return %c0_i32, %c0_i32_0 : i32, i32
  }
  func.func @transform_15(%arg0: i32) -> (i32, i32) {
    %c0_i32 = arith.constant 0 : i32
    %c0_i32_0 = arith.constant 0 : i32
    %c0_i32_1 = arith.constant 0 : i32
    return %c0_i32, %c0_i32_0 : i32, i32
  }
  func.func @transform_16(%arg0: i32) -> (i32, i32) {
    %c0_i32 = arith.constant 0 : i32
    %c0_i32_0 = arith.constant 0 : i32
    %c0_i32_1 = arith.constant 0 : i32
    return %c0_i32, %c0_i32_0 : i32, i32
  }
}

</mosaic_0001>

<llo_original>
// kernel: augment.1
$region0: #{augment.1}
  #allocation0 [shape = 'u32[]', space=smem, size = 0x4, offset = 0x4, fixed_abs, tag = 'smem constant byte address 0x4 - core index']
  #allocation1 [shape = 'u32[144,128]{1,0:T(1,128)}', space=vmem, size = 0x12000, scoped, tag = 'internal scratch']
  #allocation2 [shape = 'f32[4,32]{1,0:T(4,128)}', space=vmem, size = 0x800, scoped, tag = 'scratch operand']
  %s0 = inlined_call_operand.vmem [shape: f32[16,32], index: 0, kind: input, shape index: {}]
  %s1 = inlined_call_operand.vmem [shape: f32[16,16], index: 1, kind: input, shape index: {}]
  %s2 = inlined_call_operand.vmem [shape: f32[32,32], index: 2, kind: input, shape index: {}]
  %s3 = inlined_call_operand.vmem [shape: f32[1,32], index: 3, kind: input, shape index: {}]
  %s4 = inlined_call_operand.vmem [shape: f32[32,32], index: 4, kind: input, shape index: {}]
  %s5 = inlined_call_operand.vmem [shape: f32[1,32], index: 5, kind: input, shape index: {}]
  %s6 = inlined_call_operand.hbm [shape: f32[32,32], index: 6, kind: input, shape index: {}]
  %s7 = inlined_call_operand.hbm [shape: f32[1,32], index: 7, kind: input, shape index: {}]
  %s8 = inlined_call_operand.hbm [shape: f32[32,96], index: 8, kind: input, shape index: {}]
  %s9 = inlined_call_operand.vmem [shape: f32[1,96], index: 9, kind: input, shape index: {}]
  %s10 = inlined_call_operand.hbm [shape: f32[32,96], index: 10, kind: input, shape index: {}]
  %s11 = inlined_call_operand.vmem [shape: f32[1,96], index: 11, kind: input, shape index: {}]
  %s12 = inlined_call_operand.hbm [shape: f32[32,32], index: 12, kind: input, shape index: {}]
  %s13 = inlined_call_operand.hbm [shape: f32[1,32], index: 13, kind: input, shape index: {}]
  %s14 = inlined_call_operand.vmem [shape: f32[32,3], index: 14, kind: input, shape index: {}]
  %s15 = inlined_call_operand.hbm [shape: f32[1,3], index: 15, kind: input, shape index: {}]
  %s16 = inlined_call_operand.vmem [shape: f32[4,3], index: 16, kind: output, shape index: {}]
  %s17 = sld [smem:[#allocation0]]
  $region102: #{augment.1} parent=0
    _
  %s19 = ssub.s32 1, %s17
  %s20 = scalar_select 0, %s19, %s17
  $region1: #{augment.1} parent=0
    #allocation3 [shape = 'u8[16384]{0}', space=vmem, size = 0x4000, scoped, tag = 'input window, operand 6, single buffered']
    #allocation4 [shape = 's32[1]{0}', space=sflag, size = 0x4, scoped, tag = 'scoped memory for augment.1']
    #allocation5 [shape = 'u8[512]{0}', space=vmem, size = 0x400, scoped, tag = 'input window, operand 7, single buffered']
    #allocation6 [shape = 's32[1]{0}', space=sflag, size = 0x4, scoped, tag = 'scoped memory for augment.1']
    #allocation7 [shape = 'u8[16384]{0}', space=vmem, size = 0x4000, scoped, tag = 'input window, operand 8, single buffered']
    #allocation8 [shape = 'u8[16384]{0}', space=vmem, size = 0x4000, scoped, tag = 'input window, operand 10, single buffered']
    #allocation9 [shape = 's32[1]{0}', space=sflag, size = 0x4, scoped, tag = 'scoped memory for augment.1']
    #allocation10 [shape = 'u8[16384]{0}', space=vmem, size = 0x4000, scoped, tag = 'input window, operand 12, single buffered']
    #allocation11 [shape = 'u8[512]{0}', space=vmem, size = 0x400, scoped, tag = 'input window, operand 13, single buffered']
    #allocation12 [shape = 's32[1]{0}', space=sflag, size = 0x4, scoped, tag = 'scoped memory for augment.1']
    #allocation13 [shape = 'u8[512]{0}', space=vmem, size = 0x400, scoped, tag = 'input window, operand 15, single buffered']
    %21 = vsyncpa [#allocation4], 0
    %22 = vsyncpa [#allocation6], 0
    %23 = vsyncpa [#allocation9], 0
    %24 = vsyncpa [#allocation12], 0
    // Predicated region
    $region2: #{augment.1} parent=1 // pred_check
      _
    $region3: #{augment.1} parent=1 // pred_check_branch
      %26 = sbr.rel (0) target = $region5
    $region4: #{augment.1} parent=1 // pred_region
      _
    $region5: #{augment.1} parent=1 // pred_fallthru
      _
    // Predicated region
    $region6: #{augment.1} parent=1 // pred_check
      _
    $region7: #{augment.1} parent=1 // pred_check_branch
      %28 = sbr.rel (0) target = $region9
    $region8: #{augment.1} parent=1 // pred_region
      _
    $region9: #{augment.1} parent=1 // pred_fallthru
      _
    // Predicated region
    $region10: #{augment.1} parent=1 // pred_check
      _
    $region11: #{augment.1} parent=1 // pred_check_branch
      %30 = sbr.rel (0) target = $region13
    $region12: #{augment.1} parent=1 // pred_region
      _
    $region13: #{augment.1} parent=1 // pred_fallthru
      _
    // Predicated region
    $region14: #{augment.1} parent=1 // pred_check
      _
    $region15: #{augment.1} parent=1 // pred_check_branch
      %32 = sbr.rel (0) target = $region17
    $region16: #{augment.1} parent=1 // pred_region
      _
    $region17: #{augment.1} parent=1 // pred_fallthru
      _
    // Predicated region
    $region18: #{augment.1} parent=1 // pred_check
      _
    $region19: #{augment.1} parent=1 // pred_check_branch
      %34 = sbr.rel (0) target = $region21
    $region20: #{augment.1} parent=1 // pred_region
      _
    $region21: #{augment.1} parent=1 // pred_fallthru
      _
    // Predicated region
    $region22: #{augment.1} parent=1 // pred_check
      _
    $region23: #{augment.1} parent=1 // pred_check_branch
      %36 = sbr.rel (0) target = $region25
    $region24: #{augment.1} parent=1 // pred_region
      _
    $region25: #{augment.1} parent=1 // pred_fallthru
      _
    // Predicated region
    $region26: #{augment.1} parent=1 // pred_check
      _
    $region27: #{augment.1} parent=1 // pred_check_branch
      %38 = sbr.rel (0) target = $region29
    $region28: #{augment.1} parent=1 // pred_region
      %s40 = ssub.s32 512, 512
      %41 = vsyncadd [#allocation4], %s40
      %s42 = sshll.u32 [#allocation3], 4
      %s43 = int_to_ptr.vmem [resolvable:$true] %s42
      %48 = dma.hbm_to_vmem [thread:$0]  %s6, 512, %s43, [#allocation4], 128, 128, 8
    $region29: #{augment.1} parent=1 // pred_fallthru
      _
    // Predicated region
    $region30: #{augment.1} parent=1 // pred_check
      _
    $region31: #{augment.1} parent=1 // pred_check_branch
      %50 = sbr.rel (0) target = $region33
    $region32: #{augment.1} parent=1 // pred_region
      %s52 = ssub.s32 16, 16
      %53 = vsyncadd [#allocation6], %s52
      %s55 = sshll.u32 [#allocation5], 4
      %s56 = int_to_ptr.vmem [resolvable:$true] %s55
      %58 = dma.hbm_to_vmem [thread:$0]  %s7, 16, %s56, [#allocation6]
    $region33: #{augment.1} parent=1 // pred_fallthru
      _
    // Predicated region
    $region34: #{augment.1} parent=1 // pred_check
      _
    $region35: #{augment.1} parent=1 // pred_check_branch
      %60 = sbr.rel (0) target = $region37
    $region36: #{augment.1} parent=1 // pred_region
      %s62 = ssub.s32 512, 512
      %63 = vsyncadd [#allocation6], %s62
      %s64 = sshll.u32 [#allocation7], 4
      %s65 = int_to_ptr.vmem [resolvable:$true] %s64
      %70 = dma.hbm_to_vmem [thread:$0]  %s8, 512, %s65, [#allocation6], 128, 128, 8
    $region37: #{augment.1} parent=1 // pred_fallthru
      _
    // Predicated region
    $region38: #{augment.1} parent=1 // pred_check
      _
    $region39: #{augment.1} parent=1 // pred_check_branch
      %72 = sbr.rel (0) target = $region41
    $region40: #{augment.1} parent=1 // pred_region
      _
    $region41: #{augment.1} parent=1 // pred_fallthru
      _
    // Predicated region
    $region42: #{augment.1} parent=1 // pred_check
      _
    $region43: #{augment.1} parent=1 // pred_check_branch
      %74 = sbr.rel (0) target = $region45
    $region44: #{augment.1} parent=1 // pred_region
      %s76 = ssub.s32 512, 512
      %77 = vsyncadd [#allocation9], %s76
      %s78 = sshll.u32 [#allocation8], 4
      %s79 = int_to_ptr.vmem [resolvable:$true] %s78
      %84 = dma.hbm_to_vmem [thread:$0]  %s10, 512, %s79, [#allocation9], 128, 128, 8
    $region45: #{augment.1} parent=1 // pred_fallthru
      _
    // Predicated region
    $region46: #{augment.1} parent=1 // pred_check
      _
    $region47: #{augment.1} parent=1 // pred_check_branch
      %86 = sbr.rel (0) target = $region49
    $region48: #{augment.1} parent=1 // pred_region
      _
    $region49: #{augment.1} parent=1 // pred_fallthru
      _
    // Predicated region
    $region50: #{augment.1} parent=1 // pred_check
      _
    $region51: #{augment.1} parent=1 // pred_check_branch
      %88 = sbr.rel (0) target = $region53
    $region52: #{augment.1} parent=1 // pred_region
      %s90 = ssub.s32 512, 512
      %91 = vsyncadd [#allocation9], %s90
      %s92 = sshll.u32 [#allocation10], 4
      %s93 = int_to_ptr.vmem [resolvable:$true] %s92
      %98 = dma.hbm_to_vmem [thread:$0]  %s12, 512, %s93, [#allocation9], 128, 128, 8
    $region53: #{augment.1} parent=1 // pred_fallthru
      _
    // Predicated region
    $region54: #{augment.1} parent=1 // pred_check
      _
    $region55: #{augment.1} parent=1 // pred_check_branch
      %100 = sbr.rel (0) target = $region57
    $region56: #{augment.1} parent=1 // pred_region
      %s102 = ssub.s32 16, 16
      %103 = vsyncadd [#allocation12], %s102
      %s105 = sshll.u32 [#allocation11], 4
      %s106 = int_to_ptr.vmem [resolvable:$true] %s105
      %108 = dma.hbm_to_vmem [thread:$0]  %s13, 16, %s106, [#allocation12]
    $region57: #{augment.1} parent=1 // pred_fallthru
      _
    // Predicated region
    $region58: #{augment.1} parent=1 // pred_check
      _
    $region59: #{augment.1} parent=1 // pred_check_branch
      %110 = sbr.rel (0) target = $region61
    $region60: #{augment.1} parent=1 // pred_region
      _
    $region61: #{augment.1} parent=1 // pred_fallthru
      _
    // Predicated region
    $region62: #{augment.1} parent=1 // pred_check
      _
    $region63: #{augment.1} parent=1 // pred_check_branch
      %112 = sbr.rel (0) target = $region65
    $region64: #{augment.1} parent=1 // pred_region
      %s114 = ssub.s32 16, 16
      %115 = vsyncadd [#allocation12], %s114
      %s117 = sshll.u32 [#allocation13], 4
      %s118 = int_to_ptr.vmem [resolvable:$true] %s117
      %120 = dma.hbm_to_vmem [thread:$0]  %s15, 16, %s118, [#allocation12]
    $region65: #{augment.1} parent=1 // pred_fallthru
      _
    // Predicated region
    $region66: #{augment.1} parent=1 // pred_check
      _
    $region67: #{augment.1} parent=1 // pred_check_branch
      %122 = sbr.rel (0) target = $region69
    $region68: #{augment.1} parent=1 // pred_region
      %123 = dma.done [#allocation4], 512
    $region69: #{augment.1} parent=1 // pred_fallthru
      _
    // Predicated region
    $region70: #{augment.1} parent=1 // pred_check
      _
    $region71: #{augment.1} parent=1 // pred_check_branch
      %125 = sbr.rel (0) target = $region73
    $region72: #{augment.1} parent=1 // pred_region
      %126 = dma.done [#allocation6], 16
    $region73: #{augment.1} parent=1 // pred_fallthru
      _
    // Predicated region
    $region74: #{augment.1} parent=1 // pred_check
      _
    $region75: #{augment.1} parent=1 // pred_check_branch
      %128 = sbr.rel (0) target = $region77
    $region76: #{augment.1} parent=1 // pred_region
      %129 = dma.done [#allocation6], 512
    $region77: #{augment.1} parent=1 // pred_fallthru
      _
    // Predicated region
    $region78: #{augment.1} parent=1 // pred_check
      _
    $region79: #{augment.1} parent=1 // pred_check_branch
      %131 = sbr.rel (0) target = $region81
    $region80: #{augment.1} parent=1 // pred_region
      %132 = dma.done [#allocation9], 512
    $region81: #{augment.1} parent=1 // pred_fallthru
      _
    // Predicated region
    $region82: #{augment.1} parent=1 // pred_check
      _
    $region83: #{augment.1} parent=1 // pred_check_branch
      %134 = sbr.rel (0) target = $region85
    $region84: #{augment.1} parent=1 // pred_region
      %135 = dma.done [#allocation9], 512
    $region85: #{augment.1} parent=1 // pred_fallthru
      _
    // Predicated region
    $region86: #{augment.1} parent=1 // pred_check
      _
    $region87: #{augment.1} parent=1 // pred_check_branch
      %137 = sbr.rel (0) target = $region89
    $region88: #{augment.1} parent=1 // pred_region
      %138 = dma.done [#allocation12], 16
    $region89: #{augment.1} parent=1 // pred_fallthru
      _
    // Predicated region
    $region90: #{augment.1} parent=1 // pred_check
      _
    $region91: #{augment.1} parent=1 // pred_check_branch
      %140 = sbr.rel (0) target = $region93
    $region92: #{augment.1} parent=1 // pred_region
      %141 = dma.done [#allocation12], 16
    $region93: #{augment.1} parent=1 // pred_fallthru
      _
    %v142 = vld [vmem:[%s1] sm:$0xff]
    %v143 = vld [vmem:[%s1 + $0x8] sm:$0xff]
    %v144 = vld [vmem:[%s0] sm:$0xff]
    %v145 = vld [vmem:[%s0 + $0x8] sm:$0xff]
    %vm146 = vcmask 130048
    %v148 = vsel %vm146, %v142, 0
    %v151 = vsel %vm146, %v143, 0
    %153 = vmatprep.subr.mxu0 0.0
    %154 = vmatpush1.msra.mxu0 0.0
    %155 = vmatprep.subr.mxu0 0.0
    %156 = vmatpush1.msra.mxu0 0.0
    %157 = vmatprep.subr.mxu0 0.0
    %158 = vmatpush1.msra.mxu0 0.0
    %159 = vmatprep.subr.mxu0 0.0
    %160 = vmatpush1.msra.mxu0 0.0
    %161 = vmatprep.subr.mxu0 0.0
    %162 = vmatpush1.msra.mxu0 0.0
    %163 = vmatprep.subr.mxu0 0.0
    %164 = vmatpush1.msra.mxu0 0.0
    %165 = vmatprep.subr.mxu0 0.0
    %166 = vmatpush1.msra.mxu0 0.0
    %167 = vmatprep.subr.mxu0 0.0
    %168 = vmatpush1.msra.mxu0 0.0
    %169 = vmatprep.subr.mxu0 0.0
    %170 = vmatpush1.msra.mxu0 0.0
    %171 = vmatprep.subr.mxu0 0.0
    %172 = vmatpush1.msra.mxu0 0.0
    %173 = vmatprep.subr.mxu0 0.0
    %174 = vmatpush1.msra.mxu0 0.0
    %175 = vmatprep.subr.mxu0 0.0
    %176 = vmatpush1.msra.mxu0 0.0
    %177 = vmatprep.subr.mxu0 0.0
    %178 = vmatpush1.msra.mxu0 0.0
    %179 = vmatprep.subr.mxu0 0.0
    %180 = vmatpush1.msra.mxu0 0.0
    %181 = vmatprep.subr.mxu0 0.0
    %182 = vmatpush1.msra.mxu0 %v145
    %183 = vmatprep.subr.mxu0 0.0
    %184 = vmatpush1.msra.mxu0 %v144
    %185 = vmatprep.subr.mxu0 0.0
    %186 = vmatpush2.msra.mxu0 0.0
    %187 = vmatprep.subr.mxu0 0.0
    %188 = vmatpush2.msra.mxu0 0.0
    %189 = vmatprep.subr.mxu0 0.0
    %190 = vmatpush2.msra.mxu0 0.0
    %191 = vmatprep.subr.mxu0 0.0
    %192 = vmatpush2.msra.mxu0 0.0
    %193 = vmatprep.subr.mxu0 0.0
    %194 = vmatpush2.msra.mxu0 0.0
    %195 = vmatprep.subr.mxu0 0.0
    %196 = vmatpush2.msra.mxu0 0.0
    %197 = vmatprep.subr.mxu0 0.0
    %198 = vmatpush2.msra.mxu0 0.0
    %199 = vmatprep.subr.mxu0 0.0
    %200 = vmatpush2.msra.mxu0 0.0
    %201 = vmatprep.subr.mxu0 0.0
    %202 = vmatpush2.msra.mxu0 0.0
    %203 = vmatprep.subr.mxu0 0.0
    %204 = vmatpush2.msra.mxu0 0.0
    %205 = vmatprep.subr.mxu0 0.0
    %206 = vmatpush2.msra.mxu0 0.0
    %207 = vmatprep.subr.mxu0 0.0
    %208 = vmatpush2.msra.mxu0 0.0
    %209 = vmatprep.subr.mxu0 0.0
    %210 = vmatpush2.msra.mxu0 0.0
    %211 = vmatprep.subr.mxu0 0.0
    %212 = vmatpush2.msra.mxu0 0.0
    %213 = vmatprep.subr.mxu0 0.0
    %214 = vmatpush2.msra.mxu0 0.0
    %215 = vmatprep.subr.mxu0 0.0
    %216 = vmatpush2.msra.mxu0 0.0
    %217 = vmatprep.mubr.f32.mxu0 0.0
    %218 = vmatmul.mubr.f32.gmra.mxu0 %v148
    %v219 = vpop.f32.mrf.mxu0
    %v220 = vadd.f32 0.0, %v219
    %v221 = vpop.f32.mrf.mxu0
    %222 = vmatprep.mubr.f32.mxu0 0.0
    %223 = vmatmul.mubr.f32.gmra.mxu0 %v151
    %v224 = vpop.f32.mrf.mxu0
    %v225 = vadd.f32 0.0, %v224
    %v226 = vpop.f32.mrf.mxu0
    %227 = vdwg.mxu0
    %v228 = vld [vmem:[%s2] sm:$0xff]
    %v229 = vld [vmem:[%s2 + $0x8] sm:$0xff]
    %v230 = vld [vmem:[%s2 + $0x10] sm:$0xff]
    %v231 = vld [vmem:[%s2 + $0x18] sm:$0xff]
    %v232 = vld [vmem:[%s3] sm:$0x1]
    %v234 = vlaneseq
    %v235 = vshrl.u32 %v234, 7
    %v236 = vsub.s32 0, %v235
    %v237 = vrot.slane %v232, %v236
    %vm239 = vcmask 261120
    %v241 = vsel %vm239, %v220, 0
    %v244 = vsel %vm239, %v225, 0
    %246 = vmatprep.subr.mxu0 0.0
    %247 = vmatpush1.msra.mxu0 0.0
    %248 = vmatprep.subr.mxu0 0.0
    %249 = vmatpush1.msra.mxu0 0.0
    %250 = vmatprep.subr.mxu0 0.0
    %251 = vmatpush1.msra.mxu0 0.0
    %252 = vmatprep.subr.mxu0 0.0
    %253 = vmatpush1.msra.mxu0 0.0
    %254 = vmatprep.subr.mxu0 0.0
    %255 = vmatpush1.msra.mxu0 0.0
    %256 = vmatprep.subr.mxu0 0.0
    %257 = vmatpush1.msra.mxu0 0.0
    %258 = vmatprep.subr.mxu0 0.0
    %259 = vmatpush1.msra.mxu0 0.0
    %260 = vmatprep.subr.mxu0 0.0
    %261 = vmatpush1.msra.mxu0 0.0
    %262 = vmatprep.subr.mxu0 0.0
    %263 = vmatpush1.msra.mxu0 0.0
    %264 = vmatprep.subr.mxu0 0.0
    %265 = vmatpush1.msra.mxu0 0.0
    %266 = vmatprep.subr.mxu0 0.0
    %267 = vmatpush1.msra.mxu0 0.0
    %268 = vmatprep.subr.mxu0 0.0
    %269 = vmatpush1.msra.mxu0 0.0
    %270 = vmatprep.subr.mxu0 0.0
    %271 = vmatpush1.msra.mxu0 %v231
    %272 = vmatprep.subr.mxu0 0.0
    %273 = vmatpush1.msra.mxu0 %v230
    %274 = vmatprep.subr.mxu0 0.0
    %275 = vmatpush1.msra.mxu0 %v229
    %276 = vmatprep.subr.mxu0 0.0
    %277 = vmatpush1.msra.mxu0 %v228
    %278 = vmatprep.subr.mxu0 0.0
    %279 = vmatpush2.msra.mxu0 0.0
    %280 = vmatprep.subr.mxu0 0.0
    %281 = vmatpush2.msra.mxu0 0.0
    %282 = vmatprep.subr.mxu0 0.0
    %283 = vmatpush2.msra.mxu0 0.0
    %284 = vmatprep.subr.mxu0 0.0
    %285 = vmatpush2.msra.mxu0 0.0
    %286 = vmatprep.subr.mxu0 0.0
    %287 = vmatpush2.msra.mxu0 0.0
    %288 = vmatprep.subr.mxu0 0.0
    %289 = vmatpush2.msra.mxu0 0.0
    %290 = vmatprep.subr.mxu0 0.0
    %291 = vmatpush2.msra.mxu0 0.0
    %292 = vmatprep.subr.mxu0 0.0
    %293 = vmatpush2.msra.mxu0 0.0
    %294 = vmatprep.subr.mxu0 0.0
    %295 = vmatpush2.msra.mxu0 0.0
    %296 = vmatprep.subr.mxu0 0.0
    %297 = vmatpush2.msra.mxu0 0.0
    %298 = vmatprep.subr.mxu0 0.0
    %299 = vmatpush2.msra.mxu0 0.0
    %300 = vmatprep.subr.mxu0 0.0
    %301 = vmatpush2.msra.mxu0 0.0
    %302 = vmatprep.subr.mxu0 0.0
    %303 = vmatpush2.msra.mxu0 0.0
    %304 = vmatprep.subr.mxu0 0.0
    %305 = vmatpush2.msra.mxu0 0.0
    %306 = vmatprep.subr.mxu0 0.0
    %307 = vmatpush2.msra.mxu0 0.0
    %308 = vmatprep.subr.mxu0 0.0
    %309 = vmatpush2.msra.mxu0 0.0
    %310 = vmatprep.mubr.f32.mxu0 0.0
    %311 = vmatmul.mubr.f32.gmra.mxu0 %v241
    %v312 = vpop.f32.mrf.mxu0
    %v313 = vadd.f32 %v237, %v312
    %v314 = vpop.f32.mrf.mxu0
    %315 = vmatprep.mubr.f32.mxu0 0.0
    %316 = vmatmul.mubr.f32.gmra.mxu0 %v244
    %v317 = vpop.f32.mrf.mxu0
    %v318 = vadd.f32 %v237, %v317
    %v319 = vpop.f32.mrf.mxu0
    %320 = vdwg.mxu0
    %v321 = vmax.f32 %v313, 0.0
    %v322 = vmax.f32 %v318, 0.0
    %323 = vmatprep.subr.mxu0 0.0
    %324 = vmatpush1.msra.mxu0 0.0
    %325 = vmatprep.subr.mxu0 0.0
    %326 = vmatpush1.msra.mxu0 0.0
    %327 = vmatprep.subr.mxu0 0.0
    %328 = vmatpush1.msra.mxu0 0.0
    %329 = vmatprep.subr.mxu0 0.0
    %330 = vmatpush1.msra.mxu0 0.0
    %331 = vmatprep.subr.mxu0 0.0
    %332 = vmatpush1.msra.mxu0 0.0
    %333 = vmatprep.subr.mxu0 0.0
    %334 = vmatpush1.msra.mxu0 0.0
    %335 = vmatprep.subr.mxu0 0.0
    %336 = vmatpush1.msra.mxu0 0.0
    %337 = vmatprep.subr.mxu0 0.0
    %338 = vmatpush1.msra.mxu0 0.0
    %339 = vmatprep.subr.mxu0 0.0
    %340 = vmatpush1.msra.mxu0 0.0
    %341 = vmatprep.subr.mxu0 0.0
    %342 = vmatpush1.msra.mxu0 0.0
    %343 = vmatprep.subr.mxu0 0.0
    %344 = vmatpush1.msra.mxu0 0.0
    %345 = vmatprep.subr.mxu0 0.0
    %346 = vmatpush1.msra.mxu0 0.0
    %347 = vmatprep.subr.mxu0 0.0
    %348 = vmatpush1.msra.mxu0 0.0
    %349 = vmatprep.subr.mxu0 0.0
    %350 = vmatpush1.msra.mxu0 0.0
    %351 = vmatprep.subr.mxu0 0.0
    %352 = vmatpush1.msra.mxu0 %v322
    %353 = vmatprep.subr.mxu0 0.0
    %354 = vmatpush1.msra.mxu0 %v321
    %355 = vmatprep.subr.mxu0 0.0
    %356 = vmatpush2.msra.mxu0 0.0
    %357 = vmatprep.subr.mxu0 0.0
    %358 = vmatpush2.msra.mxu0 0.0
    %359 = vmatprep.subr.mxu0 0.0
    %360 = vmatpush2.msra.mxu0 0.0
    %361 = vmatprep.subr.mxu0 0.0
    %362 = vmatpush2.msra.mxu0 0.0
    %363 = vmatprep.subr.mxu0 0.0
    %364 = vmatpush2.msra.mxu0 0.0
    %365 = vmatprep.subr.mxu0 0.0
    %366 = vmatpush2.msra.mxu0 0.0
    %367 = vmatprep.subr.mxu0 0.0
    %368 = vmatpush2.msra.mxu0 0.0
    %369 = vmatprep.subr.mxu0 0.0
    %370 = vmatpush2.msra.mxu0 0.0
    %371 = vmatprep.subr.mxu0 0.0
    %372 = vmatpush2.msra.mxu0 0.0
    %373 = vmatprep.subr.mxu0 0.0
    %374 = vmatpush2.msra.mxu0 0.0
    %375 = vmatprep.subr.mxu0 0.0
    %376 = vmatpush2.msra.mxu0 0.0
    %377 = vmatprep.subr.mxu0 0.0
    %378 = vmatpush2.msra.mxu0 0.0
    %379 = vmatprep.subr.mxu0 0.0
    %380 = vmatpush2.msra.mxu0 0.0
    %381 = vmatprep.subr.mxu0 0.0
    %382 = vmatpush2.msra.mxu0 0.0
    %383 = vmatprep.subr.mxu0 0.0
    %384 = vmatpush2.msra.mxu0 0.0
    %385 = vmatprep.subr.mxu0 0.0
    %386 = vmatpush2.msra.mxu0 0.0
    %387 = vmatprep.mubr.f32.mxu0 0.0
    %388 = vmatmul.mubr.f32.gmra.mxu0 %v148
    %v389 = vpop.f32.mrf.mxu0
    %v390 = vadd.f32 0.0, %v389
    %v391 = vpop.f32.mrf.mxu0
    %392 = vmatprep.mubr.f32.mxu0 0.0
    %393 = vmatmul.mubr.f32.gmra.mxu0 %v151
    %v394 = vpop.f32.mrf.mxu0
    %v395 = vadd.f32 0.0, %v394
    %v396 = vpop.f32.mrf.mxu0
    %397 = vdwg.mxu0
    %v398 = vld [vmem:[%s4] sm:$0xff]
    %v399 = vld [vmem:[%s4 + $0x8] sm:$0xff]
    %v400 = vld [vmem:[%s4 + $0x10] sm:$0xff]
    %v401 = vld [vmem:[%s4 + $0x18] sm:$0xff]
    %v402 = vld [vmem:[%s5] sm:$0x1]
    %v404 = vlaneseq
    %v405 = vshrl.u32 %v404, 7
    %v406 = vsub.s32 0, %v405
    %v407 = vrot.slane %v402, %v406
    %v410 = vsel %vm239, %v390, 0
    %v413 = vsel %vm239, %v395, 0
    %415 = vmatprep.subr.mxu0 0.0
    %416 = vmatpush1.msra.mxu0 0.0
    %417 = vmatprep.subr.mxu0 0.0
    %418 = vmatpush1.msra.mxu0 0.0
    %419 = vmatprep.subr.mxu0 0.0
    %420 = vmatpush1.msra.mxu0 0.0
    %421 = vmatprep.subr.mxu0 0.0
    %422 = vmatpush1.msra.mxu0 0.0
    %423 = vmatprep.subr.mxu0 0.0
    %424 = vmatpush1.msra.mxu0 0.0
    %425 = vmatprep.subr.mxu0 0.0
    %426 = vmatpush1.msra.mxu0 0.0
    %427 = vmatprep.subr.mxu0 0.0
    %428 = vmatpush1.msra.mxu0 0.0
    %429 = vmatprep.subr.mxu0 0.0
    %430 = vmatpush1.msra.mxu0 0.0
    %431 = vmatprep.subr.mxu0 0.0
    %432 = vmatpush1.msra.mxu0 0.0
    %433 = vmatprep.subr.mxu0 0.0
    %434 = vmatpush1.msra.mxu0 0.0
    %435 = vmatprep.subr.mxu0 0.0
    %436 = vmatpush1.msra.mxu0 0.0
    %437 = vmatprep.subr.mxu0 0.0
    %438 = vmatpush1.msra.mxu0 0.0
    %439 = vmatprep.subr.mxu0 0.0
    %440 = vmatpush1.msra.mxu0 %v401
    %441 = vmatprep.subr.mxu0 0.0
    %442 = vmatpush1.msra.mxu0 %v400
    %443 = vmatprep.subr.mxu0 0.0
    %444 = vmatpush1.msra.mxu0 %v399
    %445 = vmatprep.subr.mxu0 0.0
    %446 = vmatpush1.msra.mxu0 %v398
    %447 = vmatprep.subr.mxu0 0.0
    %448 = vmatpush2.msra.mxu0 0.0
    %449 = vmatprep.subr.mxu0 0.0
    %450 = vmatpush2.msra.mxu0 0.0
    %451 = vmatprep.subr.mxu0 0.0
    %452 = vmatpush2.msra.mxu0 0.0
    %453 = vmatprep.subr.mxu0 0.0
    %454 = vmatpush2.msra.mxu0 0.0
    %455 = vmatprep.subr.mxu0 0.0
    %456 = vmatpush2.msra.mxu0 0.0
    %457 = vmatprep.subr.mxu0 0.0
    %458 = vmatpush2.msra.mxu0 0.0
    %459 = vmatprep.subr.mxu0 0.0
    %460 = vmatpush2.msra.mxu0 0.0
    %461 = vmatprep.subr.mxu0 0.0
    %462 = vmatpush2.msra.mxu0 0.0
    %463 = vmatprep.subr.mxu0 0.0
    %464 = vmatpush2.msra.mxu0 0.0
    %465 = vmatprep.subr.mxu0 0.0
    %466 = vmatpush2.msra.mxu0 0.0
    %467 = vmatprep.subr.mxu0 0.0
    %468 = vmatpush2.msra.mxu0 0.0
    %469 = vmatprep.subr.mxu0 0.0
    %470 = vmatpush2.msra.mxu0 0.0
    %471 = vmatprep.subr.mxu0 0.0
    %472 = vmatpush2.msra.mxu0 0.0
    %473 = vmatprep.subr.mxu0 0.0
    %474 = vmatpush2.msra.mxu0 0.0
    %475 = vmatprep.subr.mxu0 0.0
    %476 = vmatpush2.msra.mxu0 0.0
    %477 = vmatprep.subr.mxu0 0.0
    %478 = vmatpush2.msra.mxu0 0.0
    %479 = vmatprep.mubr.f32.mxu0 0.0
    %480 = vmatmul.mubr.f32.gmra.mxu0 %v410
    %v481 = vpop.f32.mrf.mxu0
    %v482 = vadd.f32 %v407, %v481
    %v483 = vpop.f32.mrf.mxu0
    %484 = vmatprep.mubr.f32.mxu0 0.0
    %485 = vmatmul.mubr.f32.gmra.mxu0 %v413
    %v486 = vpop.f32.mrf.mxu0
    %v487 = vadd.f32 %v407, %v486
    %v488 = vpop.f32.mrf.mxu0
    %489 = vdwg.mxu0
    %v490 = vmax.f32 %v482, 0.0
    %v491 = vmax.f32 %v487, 0.0
    %492 = vmatprep.subr.mxu0 0.0
    %493 = vmatpush1.msra.mxu0 0.0
    %494 = vmatprep.subr.mxu0 0.0
    %495 = vmatpush1.msra.mxu0 0.0
    %496 = vmatprep.subr.mxu0 0.0
    %497 = vmatpush1.msra.mxu0 0.0
    %498 = vmatprep.subr.mxu0 0.0
    %499 = vmatpush1.msra.mxu0 0.0
    %500 = vmatprep.subr.mxu0 0.0
    %501 = vmatpush1.msra.mxu0 0.0
    %502 = vmatprep.subr.mxu0 0.0
    %503 = vmatpush1.msra.mxu0 0.0
    %504 = vmatprep.subr.mxu0 0.0
    %505 = vmatpush1.msra.mxu0 0.0
    %506 = vmatprep.subr.mxu0 0.0
    %507 = vmatpush1.msra.mxu0 0.0
    %508 = vmatprep.subr.mxu0 0.0
    %509 = vmatpush1.msra.mxu0 0.0
    %510 = vmatprep.subr.mxu0 0.0
    %511 = vmatpush1.msra.mxu0 0.0
    %512 = vmatprep.subr.mxu0 0.0
    %513 = vmatpush1.msra.mxu0 0.0
    %514 = vmatprep.subr.mxu0 0.0
    %515 = vmatpush1.msra.mxu0 0.0
    %516 = vmatprep.subr.mxu0 0.0
    %517 = vmatpush1.msra.mxu0 0.0
    %518 = vmatprep.subr.mxu0 0.0
    %519 = vmatpush1.msra.mxu0 0.0
    %520 = vmatprep.subr.mxu0 0.0
    %521 = vmatpush1.msra.mxu0 %v491
    %522 = vmatprep.subr.mxu0 0.0
    %523 = vmatpush1.msra.mxu0 %v490
    %524 = vmatprep.subr.mxu0 0.0
    %525 = vmatpush2.msra.mxu0 0.0
    %526 = vmatprep.subr.mxu0 0.0
    %527 = vmatpush2.msra.mxu0 0.0
    %528 = vmatprep.subr.mxu0 0.0
    %529 = vmatpush2.msra.mxu0 0.0
    %530 = vmatprep.subr.mxu0 0.0
    %531 = vmatpush2.msra.mxu0 0.0
    %532 = vmatprep.subr.mxu0 0.0
    %533 = vmatpush2.msra.mxu0 0.0
    %534 = vmatprep.subr.mxu0 0.0
    %535 = vmatpush2.msra.mxu0 0.0
    %536 = vmatprep.subr.mxu0 0.0
    %537 = vmatpush2.msra.mxu0 0.0
    %538 = vmatprep.subr.mxu0 0.0
    %539 = vmatpush2.msra.mxu0 0.0
    %540 = vmatprep.subr.mxu0 0.0
    %541 = vmatpush2.msra.mxu0 0.0
    %542 = vmatprep.subr.mxu0 0.0
    %543 = vmatpush2.msra.mxu0 0.0
    %544 = vmatprep.subr.mxu0 0.0
    %545 = vmatpush2.msra.mxu0 0.0
    %546 = vmatprep.subr.mxu0 0.0
    %547 = vmatpush2.msra.mxu0 0.0
    %548 = vmatprep.subr.mxu0 0.0
    %549 = vmatpush2.msra.mxu0 0.0
    %550 = vmatprep.subr.mxu0 0.0
    %551 = vmatpush2.msra.mxu0 0.0
    %552 = vmatprep.subr.mxu0 0.0
    %553 = vmatpush2.msra.mxu0 0.0
    %554 = vmatprep.subr.mxu0 0.0
    %555 = vmatpush2.msra.mxu0 0.0
    %556 = vmatprep.mubr.f32.mxu0 0.0
    %557 = vmatmul.mubr.f32.gmra.mxu0 %v148
    %v558 = vpop.f32.mrf.mxu0
    %v559 = vadd.f32 0.0, %v558
    %v560 = vpop.f32.mrf.mxu0
    %561 = vmatprep.mubr.f32.mxu0 0.0
    %562 = vmatmul.mubr.f32.gmra.mxu0 %v151
    %v563 = vpop.f32.mrf.mxu0
    %v564 = vadd.f32 0.0, %v563
    %v565 = vpop.f32.mrf.mxu0
    %566 = vdwg.mxu0
    %v567 = vld [vmem:[#allocation3] sm:$0xff]
    %v568 = vld [vmem:[#allocation3 + $0x8] sm:$0xff]
    %v569 = vld [vmem:[#allocation3 + $0x10] sm:$0xff]
    %v570 = vld [vmem:[#allocation3 + $0x18] sm:$0xff]
    %v571 = vld [vmem:[#allocation5] sm:$0x1]
    %v573 = vlaneseq
    %v574 = vshrl.u32 %v573, 7
    %v575 = vsub.s32 0, %v574
    %v576 = vrot.slane %v571, %v575
    %v579 = vsel %vm239, %v559, 0
    %v582 = vsel %vm239, %v564, 0
    %584 = vmatprep.subr.mxu0 0.0
    %585 = vmatpush1.msra.mxu0 0.0
    %586 = vmatprep.subr.mxu0 0.0
    %587 = vmatpush1.msra.mxu0 0.0
    %588 = vmatprep.subr.mxu0 0.0
    %589 = vmatpush1.msra.mxu0 0.0
    %590 = vmatprep.subr.mxu0 0.0
    %591 = vmatpush1.msra.mxu0 0.0
    %592 = vmatprep.subr.mxu0 0.0
    %593 = vmatpush1.msra.mxu0 0.0
    %594 = vmatprep.subr.mxu0 0.0
    %595 = vmatpush1.msra.mxu0 0.0
    %596 = vmatprep.subr.mxu0 0.0
    %597 = vmatpush1.msra.mxu0 0.0
    %598 = vmatprep.subr.mxu0 0.0
    %599 = vmatpush1.msra.mxu0 0.0
    %600 = vmatprep.subr.mxu0 0.0
    %601 = vmatpush1.msra.mxu0 0.0
    %602 = vmatprep.subr.mxu0 0.0
    %603 = vmatpush1.msra.mxu0 0.0
    %604 = vmatprep.subr.mxu0 0.0
    %605 = vmatpush1.msra.mxu0 0.0
    %606 = vmatprep.subr.mxu0 0.0
    %607 = vmatpush1.msra.mxu0 0.0
    %608 = vmatprep.subr.mxu0 0.0
    %609 = vmatpush1.msra.mxu0 %v570
    %610 = vmatprep.subr.mxu0 0.0
    %611 = vmatpush1.msra.mxu0 %v569
    %612 = vmatprep.subr.mxu0 0.0
    %613 = vmatpush1.msra.mxu0 %v568
    %614 = vmatprep.subr.mxu0 0.0
    %615 = vmatpush1.msra.mxu0 %v567
    %616 = vmatprep.subr.mxu0 0.0
    %617 = vmatpush2.msra.mxu0 0.0
    %618 = vmatprep.subr.mxu0 0.0
    %619 = vmatpush2.msra.mxu0 0.0
    %620 = vmatprep.subr.mxu0 0.0
    %621 = vmatpush2.msra.mxu0 0.0
    %622 = vmatprep.subr.mxu0 0.0
    %623 = vmatpush2.msra.mxu0 0.0
    %624 = vmatprep.subr.mxu0 0.0
    %625 = vmatpush2.msra.mxu0 0.0
    %626 = vmatprep.subr.mxu0 0.0
    %627 = vmatpush2.msra.mxu0 0.0
    %628 = vmatprep.subr.mxu0 0.0
    %629 = vmatpush2.msra.mxu0 0.0
    %630 = vmatprep.subr.mxu0 0.0
    %631 = vmatpush2.msra.mxu0 0.0
    %632 = vmatprep.subr.mxu0 0.0
    %633 = vmatpush2.msra.mxu0 0.0
    %634 = vmatprep.subr.mxu0 0.0
    %635 = vmatpush2.msra.mxu0 0.0
    %636 = vmatprep.subr.mxu0 0.0
    %637 = vmatpush2.msra.mxu0 0.0
    %638 = vmatprep.subr.mxu0 0.0
    %639 = vmatpush2.msra.mxu0 0.0
    %640 = vmatprep.subr.mxu0 0.0
    %641 = vmatpush2.msra.mxu0 0.0
    %642 = vmatprep.subr.mxu0 0.0
    %643 = vmatpush2.msra.mxu0 0.0
    %644 = vmatprep.subr.mxu0 0.0
    %645 = vmatpush2.msra.mxu0 0.0
    %646 = vmatprep.subr.mxu0 0.0
    %647 = vmatpush2.msra.mxu0 0.0
    %648 = vmatprep.mubr.f32.mxu0 0.0
    %649 = vmatmul.mubr.f32.gmra.mxu0 %v579
    %v650 = vpop.f32.mrf.mxu0
    %v651 = vadd.f32 %v576, %v650
    %v652 = vpop.f32.mrf.mxu0
    %653 = vmatprep.mubr.f32.mxu0 0.0
    %654 = vmatmul.mubr.f32.gmra.mxu0 %v582
    %v655 = vpop.f32.mrf.mxu0
    %v656 = vadd.f32 %v576, %v655
    %v657 = vpop.f32.mrf.mxu0
    %658 = vdwg.mxu0
    %v659 = vmax.f32 %v651, 0.0
    %v660 = vmax.f32 %v656, 0.0
    %v661 = vsel %vm239, %v659, 0.0
    %v662 = vsel %vm239, %v660, 0.0
    %v663 = vadd.f32 %v661, %v662
    %v664 = vrot.slane %v663, 4
    %v665 = vadd.f32 %v663, %v664
    %v666 = vrot.slane %v665, 2
    %v667 = vadd.f32 %v665, %v666
    %v668 = vrot.slane %v667, 1
    %v669 = vadd.f32 %v667, %v668
    %v670 = vrcp.pop 16.0
    %v671 = vmul.f32 %v669, %v670
    %v672 = vld [vmem:[#allocation7] sm:$0xff]
    %v673 = vld [vmem:[#allocation7 + $0x8] sm:$0xff]
    %v674 = vld [vmem:[#allocation7 + $0x10] sm:$0xff]
    %v675 = vld [vmem:[#allocation7 + $0x18] sm:$0xff]
    %v676 = vld [vmem:[%s9] sm:$0x1]
    %v678 = vsel %vm239, %v671, 0
    %680 = vmatprep.subr.mxu0 0.0
    %681 = vmatpush1.msra.mxu0 0.0
    %682 = vmatprep.subr.mxu0 0.0
    %683 = vmatpush1.msra.mxu0 0.0
    %684 = vmatprep.subr.mxu0 0.0
    %685 = vmatpush1.msra.mxu0 0.0
    %686 = vmatprep.subr.mxu0 0.0
    %687 = vmatpush1.msra.mxu0 0.0
    %688 = vmatprep.subr.mxu0 0.0
    %689 = vmatpush1.msra.mxu0 0.0
    %690 = vmatprep.subr.mxu0 0.0
    %691 = vmatpush1.msra.mxu0 0.0
    %692 = vmatprep.subr.mxu0 0.0
    %693 = vmatpush1.msra.mxu0 0.0
    %694 = vmatprep.subr.mxu0 0.0
    %695 = vmatpush1.msra.mxu0 0.0
    %696 = vmatprep.subr.mxu0 0.0
    %697 = vmatpush1.msra.mxu0 0.0
    %698 = vmatprep.subr.mxu0 0.0
    %699 = vmatpush1.msra.mxu0 0.0
    %700 = vmatprep.subr.mxu0 0.0
    %701 = vmatpush1.msra.mxu0 0.0
    %702 = vmatprep.subr.mxu0 0.0
    %703 = vmatpush1.msra.mxu0 0.0
    %704 = vmatprep.subr.mxu0 0.0
    %705 = vmatpush1.msra.mxu0 %v675
    %706 = vmatprep.subr.mxu0 0.0
    %707 = vmatpush1.msra.mxu0 %v674
    %708 = vmatprep.subr.mxu0 0.0
    %709 = vmatpush1.msra.mxu0 %v673
    %710 = vmatprep.subr.mxu0 0.0
    %711 = vmatpush1.msra.mxu0 %v672
    %712 = vmatprep.subr.mxu0 0.0
    %713 = vmatpush2.msra.mxu0 0.0
    %714 = vmatprep.subr.mxu0 0.0
    %715 = vmatpush2.msra.mxu0 0.0
    %716 = vmatprep.subr.mxu0 0.0
    %717 = vmatpush2.msra.mxu0 0.0
    %718 = vmatprep.subr.mxu0 0.0
    %719 = vmatpush2.msra.mxu0 0.0
    %720 = vmatprep.subr.mxu0 0.0
    %721 = vmatpush2.msra.mxu0 0.0
    %722 = vmatprep.subr.mxu0 0.0
    %723 = vmatpush2.msra.mxu0 0.0
    %724 = vmatprep.subr.mxu0 0.0
    %725 = vmatpush2.msra.mxu0 0.0
    %726 = vmatprep.subr.mxu0 0.0
    %727 = vmatpush2.msra.mxu0 0.0
    %728 = vmatprep.subr.mxu0 0.0
    %729 = vmatpush2.msra.mxu0 0.0
    %730 = vmatprep.subr.mxu0 0.0
    %731 = vmatpush2.msra.mxu0 0.0
    %732 = vmatprep.subr.mxu0 0.0
    %733 = vmatpush2.msra.mxu0 0.0
    %734 = vmatprep.subr.mxu0 0.0
    %735 = vmatpush2.msra.mxu0 0.0
    %736 = vmatprep.subr.mxu0 0.0
    %737 = vmatpush2.msra.mxu0 0.0
    %738 = vmatprep.subr.mxu0 0.0
    %739 = vmatpush2.msra.mxu0 0.0
    %740 = vmatprep.subr.mxu0 0.0
    %741 = vmatpush2.msra.mxu0 0.0
    %742 = vmatprep.subr.mxu0 0.0
    %743 = vmatpush2.msra.mxu0 0.0
    %744 = vmatprep.mubr.f32.mxu0 0.0
    %745 = vmatmul.mubr.f32.gmra.mxu0 %v678
    %v746 = vpop.f32.mrf.mxu0
    %v747 = vadd.f32 %v676, %v746
    %v748 = vpop.f32.mrf.mxu0
    %749 = vdwg.mxu0
    %v750 = vld [vmem:[#allocation8] sm:$0xff]
    %v751 = vld [vmem:[#allocation8 + $0x8] sm:$0xff]
    %v752 = vld [vmem:[#allocation8 + $0x10] sm:$0xff]
    %v753 = vld [vmem:[#allocation8 + $0x18] sm:$0xff]
    %v754 = vld [vmem:[%s11] sm:$0x1]
    %v756 = vsel %vm239, 0.0, 0
    %758 = vmatprep.subr.mxu0 0.0
    %759 = vmatpush1.msra.mxu0 0.0
    %760 = vmatprep.subr.mxu0 0.0
    %761 = vmatpush1.msra.mxu0 0.0
    %762 = vmatprep.subr.mxu0 0.0
    %763 = vmatpush1.msra.mxu0 0.0
    %764 = vmatprep.subr.mxu0 0.0
    %765 = vmatpush1.msra.mxu0 0.0
    %766 = vmatprep.subr.mxu0 0.0
    %767 = vmatpush1.msra.mxu0 0.0
    %768 = vmatprep.subr.mxu0 0.0
    %769 = vmatpush1.msra.mxu0 0.0
    %770 = vmatprep.subr.mxu0 0.0
    %771 = vmatpush1.msra.mxu0 0.0
    %772 = vmatprep.subr.mxu0 0.0
    %773 = vmatpush1.msra.mxu0 0.0
    %774 = vmatprep.subr.mxu0 0.0
    %775 = vmatpush1.msra.mxu0 0.0
    %776 = vmatprep.subr.mxu0 0.0
    %777 = vmatpush1.msra.mxu0 0.0
    %778 = vmatprep.subr.mxu0 0.0
    %779 = vmatpush1.msra.mxu0 0.0
    %780 = vmatprep.subr.mxu0 0.0
    %781 = vmatpush1.msra.mxu0 0.0
    %782 = vmatprep.subr.mxu0 0.0
    %783 = vmatpush1.msra.mxu0 %v753
    %784 = vmatprep.subr.mxu0 0.0
    %785 = vmatpush1.msra.mxu0 %v752
    %786 = vmatprep.subr.mxu0 0.0
    %787 = vmatpush1.msra.mxu0 %v751
    %788 = vmatprep.subr.mxu0 0.0
    %789 = vmatpush1.msra.mxu0 %v750
    %790 = vmatprep.subr.mxu0 0.0
    %791 = vmatpush2.msra.mxu0 0.0
    %792 = vmatprep.subr.mxu0 0.0
    %793 = vmatpush2.msra.mxu0 0.0
    %794 = vmatprep.subr.mxu0 0.0
    %795 = vmatpush2.msra.mxu0 0.0
    %796 = vmatprep.subr.mxu0 0.0
    %797 = vmatpush2.msra.mxu0 0.0
    %798 = vmatprep.subr.mxu0 0.0
    %799 = vmatpush2.msra.mxu0 0.0
    %800 = vmatprep.subr.mxu0 0.0
    %801 = vmatpush2.msra.mxu0 0.0
    %802 = vmatprep.subr.mxu0 0.0
    %803 = vmatpush2.msra.mxu0 0.0
    %804 = vmatprep.subr.mxu0 0.0
    %805 = vmatpush2.msra.mxu0 0.0
    %806 = vmatprep.subr.mxu0 0.0
    %807 = vmatpush2.msra.mxu0 0.0
    %808 = vmatprep.subr.mxu0 0.0
    %809 = vmatpush2.msra.mxu0 0.0
    %810 = vmatprep.subr.mxu0 0.0
    %811 = vmatpush2.msra.mxu0 0.0
    %812 = vmatprep.subr.mxu0 0.0
    %813 = vmatpush2.msra.mxu0 0.0
    %814 = vmatprep.subr.mxu0 0.0
    %815 = vmatpush2.msra.mxu0 0.0
    %816 = vmatprep.subr.mxu0 0.0
    %817 = vmatpush2.msra.mxu0 0.0
    %818 = vmatprep.subr.mxu0 0.0
    %819 = vmatpush2.msra.mxu0 0.0
    %820 = vmatprep.subr.mxu0 0.0
    %821 = vmatpush2.msra.mxu0 0.0
    %822 = vmatprep.mubr.f32.mxu0 0.0
    %823 = vmatmul.mubr.f32.gmra.mxu0 %v756
    %v824 = vpop.f32.mrf.mxu0
    %v825 = vadd.f32 %v754, %v824
    %v826 = vpop.f32.mrf.mxu0
    %827 = vdwg.mxu0
    %v828 = vadd.f32 %v747, %v825
    %v829 = vxor.u32 %v828, 2147483648
    %v830 = vmul.f32 %v829, 1.442695
    %v831 = vpow.pop %v830
    %v832 = vadd.f32 %v831, 1.0
    %v833 = vrcp.pop %v832
    %v834 = vmul.f32 1.0, %v833
    %836 = vrot.lane.b32.xlu0 %v825, 64
    %v837 = vpop.permute.xlu0 %836
    %v839 = vmul.f32 %v834, %v837
    %841 = vrot.lane.b32.xlu0 %v839, 64
    %v842 = vpop.permute.xlu0 %841
    %v844 = vadd.f32 %v747, %v842
    %v845 = vtanh.pop %v844
    %v846 = vsub.f32 1.0, %v834
    %848 = vrot.lane.b32.xlu0 %v845, 96
    %v849 = vpop.permute.xlu0 %848
    %v851 = vmul.f32 %v846, %v849
    %v852 = vmul.f32 %v834, 0.0
    %v853 = vadd.f32 %v851, %v852
    %855 = vrot.lane.b32.xlu0 %v853, 96
    %v856 = vpop.permute.xlu0 %855
    %vm858 = vcmask 253952
    %859 = vst.msk [vmem:[#allocation2] sm:$0x1] %vm858, %v856
    %v860 = vld [vmem:[#allocation8] sm:$0xff]
    %v861 = vld [vmem:[#allocation8 + $0x8] sm:$0xff]
    %v862 = vld [vmem:[#allocation8 + $0x10] sm:$0xff]
    %v863 = vld [vmem:[#allocation8 + $0x18] sm:$0xff]
    %v864 = vld [vmem:[%s11] sm:$0x1]
    %v865 = vsel %vm239, %v856, 0
    %867 = vmatprep.subr.mxu0 0.0
    %868 = vmatpush1.msra.mxu0 0.0
    %869 = vmatprep.subr.mxu0 0.0
    %870 = vmatpush1.msra.mxu0 0.0
    %871 = vmatprep.subr.mxu0 0.0
    %872 = vmatpush1.msra.mxu0 0.0
    %873 = vmatprep.subr.mxu0 0.0
    %874 = vmatpush1.msra.mxu0 0.0
    %875 = vmatprep.subr.mxu0 0.0
    %876 = vmatpush1.msra.mxu0 0.0
    %877 = vmatprep.subr.mxu0 0.0
    %878 = vmatpush1.msra.mxu0 0.0
    %879 = vmatprep.subr.mxu0 0.0
    %880 = vmatpush1.msra.mxu0 0.0
    %881 = vmatprep.subr.mxu0 0.0
    %882 = vmatpush1.msra.mxu0 0.0
    %883 = vmatprep.subr.mxu0 0.0
    %884 = vmatpush1.msra.mxu0 0.0
    %885 = vmatprep.subr.mxu0 0.0
    %886 = vmatpush1.msra.mxu0 0.0
    %887 = vmatprep.subr.mxu0 0.0
    %888 = vmatpush1.msra.mxu0 0.0
    %889 = vmatprep.subr.mxu0 0.0
    %890 = vmatpush1.msra.mxu0 0.0
    %891 = vmatprep.subr.mxu0 0.0
    %892 = vmatpush1.msra.mxu0 %v863
    %893 = vmatprep.subr.mxu0 0.0
    %894 = vmatpush1.msra.mxu0 %v862
    %895 = vmatprep.subr.mxu0 0.0
    %896 = vmatpush1.msra.mxu0 %v861
    %897 = vmatprep.subr.mxu0 0.0
    %898 = vmatpush1.msra.mxu0 %v860
    %899 = vmatprep.subr.mxu0 0.0
    %900 = vmatpush2.msra.mxu0 0.0
    %901 = vmatprep.subr.mxu0 0.0
    %902 = vmatpush2.msra.mxu0 0.0
    %903 = vmatprep.subr.mxu0 0.0
    %904 = vmatpush2.msra.mxu0 0.0
    %905 = vmatprep.subr.mxu0 0.0
    %906 = vmatpush2.msra.mxu0 0.0
    %907 = vmatprep.subr.mxu0 0.0
    %908 = vmatpush2.msra.mxu0 0.0
    %909 = vmatprep.subr.mxu0 0.0
    %910 = vmatpush2.msra.mxu0 0.0
    %911 = vmatprep.subr.mxu0 0.0
    %912 = vmatpush2.msra.mxu0 0.0
    %913 = vmatprep.subr.mxu0 0.0
    %914 = vmatpush2.msra.mxu0 0.0
    %915 = vmatprep.subr.mxu0 0.0
    %916 = vmatpush2.msra.mxu0 0.0
    %917 = vmatprep.subr.mxu0 0.0
    %918 = vmatpush2.msra.mxu0 0.0
    %919 = vmatprep.subr.mxu0 0.0
    %920 = vmatpush2.msra.mxu0 0.0
    %921 = vmatprep.subr.mxu0 0.0
    %922 = vmatpush2.msra.mxu0 0.0
    %923 = vmatprep.subr.mxu0 0.0
    %924 = vmatpush2.msra.mxu0 0.0
    %925 = vmatprep.subr.mxu0 0.0
    %926 = vmatpush2.msra.mxu0 0.0
    %927 = vmatprep.subr.mxu0 0.0
    %928 = vmatpush2.msra.mxu0 0.0
    %929 = vmatprep.subr.mxu0 0.0
    %930 = vmatpush2.msra.mxu0 0.0
    %931 = vmatprep.mubr.f32.mxu0 0.0
    %932 = vmatmul.mubr.f32.gmra.mxu0 %v865
    %v933 = vpop.f32.mrf.mxu0
    %v934 = vadd.f32 %v864, %v933
    %v935 = vpop.f32.mrf.mxu0
    %936 = vdwg.mxu0
    %v937 = vadd.f32 %v747, %v934
    %v938 = vxor.u32 %v937, 2147483648
    %v939 = vmul.f32 %v938, 1.442695
    %v940 = vpow.pop %v939
    %v941 = vadd.f32 %v940, 1.0
    %v942 = vrcp.pop %v941
    %v943 = vmul.f32 1.0, %v942
    %945 = vrot.lane.b32.xlu0 %v934, 64
    %v946 = vpop.permute.xlu0 %945
    %v948 = vmul.f32 %v943, %v946
    %950 = vrot.lane.b32.xlu0 %v948, 64
    %v951 = vpop.permute.xlu0 %950
    %v953 = vadd.f32 %v747, %v951
    %v954 = vtanh.pop %v953
    %v955 = vsub.f32 1.0, %v943
    %957 = vrot.lane.b32.xlu0 %v954, 96
    %v958 = vpop.permute.xlu0 %957
    %v960 = vmul.f32 %v955, %v958
    %v961 = vmul.f32 %v943, %v853
    %v962 = vadd.f32 %v960, %v961
    %964 = vrot.lane.b32.xlu0 %v962, 96
    %v965 = vpop.permute.xlu0 %964
    %967 = vst.msk [vmem:[#allocation2 + $0x1] sm:$0x1] %vm858, %v965
    %v968 = vld [vmem:[#allocation8] sm:$0xff]
    %v969 = vld [vmem:[#allocation8 + $0x8] sm:$0xff]
    %v970 = vld [vmem:[#allocation8 + $0x10] sm:$0xff]
    %v971 = vld [vmem:[#allocation8 + $0x18] sm:$0xff]
    %v972 = vld [vmem:[%s11] sm:$0x1]
    %v973 = vsel %vm239, %v965, 0
    %975 = vmatprep.subr.mxu0 0.0
    %976 = vmatpush1.msra.mxu0 0.0
    %977 = vmatprep.subr.mxu0 0.0
    %978 = vmatpush1.msra.mxu0 0.0
    %979 = vmatprep.subr.mxu0 0.0
    %980 = vmatpush1.msra.mxu0 0.0
    %981 = vmatprep.subr.mxu0 0.0
    %982 = vmatpush1.msra.mxu0 0.0
    %983 = vmatprep.subr.mxu0 0.0
    %984 = vmatpush1.msra.mxu0 0.0
    %985 = vmatprep.subr.mxu0 0.0
    %986 = vmatpush1.msra.mxu0 0.0
    %987 = vmatprep.subr.mxu0 0.0
    %988 = vmatpush1.msra.mxu0 0.0
    %989 = vmatprep.subr.mxu0 0.0
    %990 = vmatpush1.msra.mxu0 0.0
    %991 = vmatprep.subr.mxu0 0.0
    %992 = vmatpush1.msra.mxu0 0.0
    %993 = vmatprep.subr.mxu0 0.0
    %994 = vmatpush1.msra.mxu0 0.0
    %995 = vmatprep.subr.mxu0 0.0
    %996 = vmatpush1.msra.mxu0 0.0
    %997 = vmatprep.subr.mxu0 0.0
    %998 = vmatpush1.msra.mxu0 0.0
    %999 = vmatprep.subr.mxu0 0.0
    %1000 = vmatpush1.msra.mxu0 %v971
    %1001 = vmatprep.subr.mxu0 0.0
    %1002 = vmatpush1.msra.mxu0 %v970
    %1003 = vmatprep.subr.mxu0 0.0
    %1004 = vmatpush1.msra.mxu0 %v969
    %1005 = vmatprep.subr.mxu0 0.0
    %1006 = vmatpush1.msra.mxu0 %v968
    %1007 = vmatprep.subr.mxu0 0.0
    %1008 = vmatpush2.msra.mxu0 0.0
    %1009 = vmatprep.subr.mxu0 0.0
    %1010 = vmatpush2.msra.mxu0 0.0
    %1011 = vmatprep.subr.mxu0 0.0
    %1012 = vmatpush2.msra.mxu0 0.0
    %1013 = vmatprep.subr.mxu0 0.0
    %1014 = vmatpush2.msra.mxu0 0.0
    %1015 = vmatprep.subr.mxu0 0.0
    %1016 = vmatpush2.msra.mxu0 0.0
    %1017 = vmatprep.subr.mxu0 0.0
    %1018 = vmatpush2.msra.mxu0 0.0
    %1019 = vmatprep.subr.mxu0 0.0
    %1020 = vmatpush2.msra.mxu0 0.0
    %1021 = vmatprep.subr.mxu0 0.0
    %1022 = vmatpush2.msra.mxu0 0.0
    %1023 = vmatprep.subr.mxu0 0.0
    %1024 = vmatpush2.msra.mxu0 0.0
    %1025 = vmatprep.subr.mxu0 0.0
    %1026 = vmatpush2.msra.mxu0 0.0
    %1027 = vmatprep.subr.mxu0 0.0
    %1028 = vmatpush2.msra.mxu0 0.0
    %1029 = vmatprep.subr.mxu0 0.0
    %1030 = vmatpush2.msra.mxu0 0.0
    %1031 = vmatprep.subr.mxu0 0.0
    %1032 = vmatpush2.msra.mxu0 0.0
    %1033 = vmatprep.subr.mxu0 0.0
    %1034 = vmatpush2.msra.mxu0 0.0
    %1035 = vmatprep.subr.mxu0 0.0
    %1036 = vmatpush2.msra.mxu0 0.0
    %1037 = vmatprep.subr.mxu0 0.0
    %1038 = vmatpush2.msra.mxu0 0.0
    %1039 = vmatprep.mubr.f32.mxu0 0.0
    %1040 = vmatmul.mubr.f32.gmra.mxu0 %v973
    %v1041 = vpop.f32.mrf.mxu0
    %v1042 = vadd.f32 %v972, %v1041
    %v1043 = vpop.f32.mrf.mxu0
    %1044 = vdwg.mxu0
    %v1045 = vadd.f32 %v747, %v1042
    %v1046 = vxor.u32 %v1045, 2147483648
    %v1047 = vmul.f32 %v1046, 1.442695
    %v1048 = vpow.pop %v1047
    %v1049 = vadd.f32 %v1048, 1.0
    %v1050 = vrcp.pop %v1049
    %v1051 = vmul.f32 1.0, %v1050
    %1053 = vrot.lane.b32.xlu0 %v1042, 64
    %v1054 = vpop.permute.xlu0 %1053
    %v1056 = vmul.f32 %v1051, %v1054
    %1058 = vrot.lane.b32.xlu0 %v1056, 64
    %v1059 = vpop.permute.xlu0 %1058
    %v1061 = vadd.f32 %v747, %v1059
    %v1062 = vtanh.pop %v1061
    %v1063 = vsub.f32 1.0, %v1051
    %1065 = vrot.lane.b32.xlu0 %v1062, 96
    %v1066 = vpop.permute.xlu0 %1065
    %v1068 = vmul.f32 %v1063, %v1066
    %v1069 = vmul.f32 %v1051, %v962
    %v1070 = vadd.f32 %v1068, %v1069
    %1072 = vrot.lane.b32.xlu0 %v1070, 96
    %v1073 = vpop.permute.xlu0 %1072
    %1075 = vst.msk [vmem:[#allocation2 + $0x2] sm:$0x1] %vm858, %v1073
    %v1076 = vld [vmem:[#allocation8] sm:$0xff]
    %v1077 = vld [vmem:[#allocation8 + $0x8] sm:$0xff]
    %v1078 = vld [vmem:[#allocation8 + $0x10] sm:$0xff]
    %v1079 = vld [vmem:[#allocation8 + $0x18] sm:$0xff]
    %v1080 = vld [vmem:[%s11] sm:$0x1]
    %v1081 = vsel %vm239, %v1073, 0
    %1083 = vmatprep.subr.mxu0 0.0
    %1084 = vmatpush1.msra.mxu0 0.0
    %1085 = vmatprep.subr.mxu0 0.0
    %1086 = vmatpush1.msra.mxu0 0.0
    %1087 = vmatprep.subr.mxu0 0.0
    %1088 = vmatpush1.msra.mxu0 0.0
    %1089 = vmatprep.subr.mxu0 0.0
    %1090 = vmatpush1.msra.mxu0 0.0
    %1091 = vmatprep.subr.mxu0 0.0
    %1092 = vmatpush1.msra.mxu0 0.0
    %1093 = vmatprep.subr.mxu0 0.0
    %1094 = vmatpush1.msra.mxu0 0.0
    %1095 = vmatprep.subr.mxu0 0.0
    %1096 = vmatpush1.msra.mxu0 0.0
    %1097 = vmatprep.subr.mxu0 0.0
    %1098 = vmatpush1.msra.mxu0 0.0
    %1099 = vmatprep.subr.mxu0 0.0
    %1100 = vmatpush1.msra.mxu0 0.0
    %1101 = vmatprep.subr.mxu0 0.0
    %1102 = vmatpush1.msra.mxu0 0.0
    %1103 = vmatprep.subr.mxu0 0.0
    %1104 = vmatpush1.msra.mxu0 0.0
    %1105 = vmatprep.subr.mxu0 0.0
    %1106 = vmatpush1.msra.mxu0 0.0
    %1107 = vmatprep.subr.mxu0 0.0
    %1108 = vmatpush1.msra.mxu0 %v1079
    %1109 = vmatprep.subr.mxu0 0.0
    %1110 = vmatpush1.msra.mxu0 %v1078
    %1111 = vmatprep.subr.mxu0 0.0
    %1112 = vmatpush1.msra.mxu0 %v1077
    %1113 = vmatprep.subr.mxu0 0.0
    %1114 = vmatpush1.msra.mxu0 %v1076
    %1115 = vmatprep.subr.mxu0 0.0
    %1116 = vmatpush2.msra.mxu0 0.0
    %1117 = vmatprep.subr.mxu0 0.0
    %1118 = vmatpush2.msra.mxu0 0.0
    %1119 = vmatprep.subr.mxu0 0.0
    %1120 = vmatpush2.msra.mxu0 0.0
    %1121 = vmatprep.subr.mxu0 0.0
    %1122 = vmatpush2.msra.mxu0 0.0
    %1123 = vmatprep.subr.mxu0 0.0
    %1124 = vmatpush2.msra.mxu0 0.0
    %1125 = vmatprep.subr.mxu0 0.0
    %1126 = vmatpush2.msra.mxu0 0.0
    %1127 = vmatprep.subr.mxu0 0.0
    %1128 = vmatpush2.msra.mxu0 0.0
    %1129 = vmatprep.subr.mxu0 0.0
    %1130 = vmatpush2.msra.mxu0 0.0
    %1131 = vmatprep.subr.mxu0 0.0
    %1132 = vmatpush2.msra.mxu0 0.0
    %1133 = vmatprep.subr.mxu0 0.0
    %1134 = vmatpush2.msra.mxu0 0.0
    %1135 = vmatprep.subr.mxu0 0.0
    %1136 = vmatpush2.msra.mxu0 0.0
    %1137 = vmatprep.subr.mxu0 0.0
    %1138 = vmatpush2.msra.mxu0 0.0
    %1139 = vmatprep.subr.mxu0 0.0
    %1140 = vmatpush2.msra.mxu0 0.0
    %1141 = vmatprep.subr.mxu0 0.0
    %1142 = vmatpush2.msra.mxu0 0.0
    %1143 = vmatprep.subr.mxu0 0.0
    %1144 = vmatpush2.msra.mxu0 0.0
    %1145 = vmatprep.subr.mxu0 0.0
    %1146 = vmatpush2.msra.mxu0 0.0
    %1147 = vmatprep.mubr.f32.mxu0 0.0
    %1148 = vmatmul.mubr.f32.gmra.mxu0 %v1081
    %v1149 = vpop.f32.mrf.mxu0
    %v1150 = vadd.f32 %v1080, %v1149
    %v1151 = vpop.f32.mrf.mxu0
    %1152 = vdwg.mxu0
    %v1153 = vadd.f32 %v747, %v1150
    %v1154 = vxor.u32 %v1153, 2147483648
    %v1155 = vmul.f32 %v1154, 1.442695
    %v1156 = vpow.pop %v1155
    %v1157 = vadd.f32 %v1156, 1.0
    %v1158 = vrcp.pop %v1157
    %v1159 = vmul.f32 1.0, %v1158
    %1161 = vrot.lane.b32.xlu0 %v1150, 64
    %v1162 = vpop.permute.xlu0 %1161
    %v1164 = vmul.f32 %v1159, %v1162
    %1166 = vrot.lane.b32.xlu0 %v1164, 64
    %v1167 = vpop.permute.xlu0 %1166
    %v1169 = vadd.f32 %v747, %v1167
    %v1170 = vtanh.pop %v1169
    %v1171 = vsub.f32 1.0, %v1159
    %1173 = vrot.lane.b32.xlu0 %v1170, 96
    %v1174 = vpop.permute.xlu0 %1173
    %v1176 = vmul.f32 %v1171, %v1174
    %v1177 = vmul.f32 %v1159, %v1070
    %v1178 = vadd.f32 %v1176, %v1177
    %1180 = vrot.lane.b32.xlu0 %v1178, 96
    %v1181 = vpop.permute.xlu0 %1180
    %1183 = vst.msk [vmem:[#allocation2 + $0x3] sm:$0x1] %vm858, %v1181
    %v1184 = vld [vmem:[#allocation2] sm:$0xf]
    %v1185 = vld [vmem:[#allocation10] sm:$0xff]
    %v1186 = vld [vmem:[#allocation10 + $0x8] sm:$0xff]
    %v1187 = vld [vmem:[#allocation10 + $0x10] sm:$0xff]
    %v1188 = vld [vmem:[#allocation10 + $0x18] sm:$0xff]
    %v1189 = vld [vmem:[#allocation11] sm:$0x1]
    %v1191 = vlaneseq
    %v1192 = vshrl.u32 %v1191, 7
    %v1193 = vsub.s32 0, %v1192
    %v1194 = vrot.slane %v1189, %v1193
    %v1197 = vsel %vm239, %v1184, 0
    %1199 = vmatprep.subr.mxu0 0.0
    %1200 = vmatpush1.msra.mxu0 0.0
    %1201 = vmatprep.subr.mxu0 0.0
    %1202 = vmatpush1.msra.mxu0 0.0
    %1203 = vmatprep.subr.mxu0 0.0
    %1204 = vmatpush1.msra.mxu0 0.0
    %1205 = vmatprep.subr.mxu0 0.0
    %1206 = vmatpush1.msra.mxu0 0.0
    %1207 = vmatprep.subr.mxu0 0.0
    %1208 = vmatpush1.msra.mxu0 0.0
    %1209 = vmatprep.subr.mxu0 0.0
    %1210 = vmatpush1.msra.mxu0 0.0
    %1211 = vmatprep.subr.mxu0 0.0
    %1212 = vmatpush1.msra.mxu0 0.0
    %1213 = vmatprep.subr.mxu0 0.0
    %1214 = vmatpush1.msra.mxu0 0.0
    %1215 = vmatprep.subr.mxu0 0.0
    %1216 = vmatpush1.msra.mxu0 0.0
    %1217 = vmatprep.subr.mxu0 0.0
    %1218 = vmatpush1.msra.mxu0 0.0
    %1219 = vmatprep.subr.mxu0 0.0
    %1220 = vmatpush1.msra.mxu0 0.0
    %1221 = vmatprep.subr.mxu0 0.0
    %1222 = vmatpush1.msra.mxu0 0.0
    %1223 = vmatprep.subr.mxu0 0.0
    %1224 = vmatpush1.msra.mxu0 %v1188
    %1225 = vmatprep.subr.mxu0 0.0
    %1226 = vmatpush1.msra.mxu0 %v1187
    %1227 = vmatprep.subr.mxu0 0.0
    %1228 = vmatpush1.msra.mxu0 %v1186
    %1229 = vmatprep.subr.mxu0 0.0
    %1230 = vmatpush1.msra.mxu0 %v1185
    %1231 = vmatprep.subr.mxu0 0.0
    %1232 = vmatpush2.msra.mxu0 0.0
    %1233 = vmatprep.subr.mxu0 0.0
    %1234 = vmatpush2.msra.mxu0 0.0
    %1235 = vmatprep.subr.mxu0 0.0
    %1236 = vmatpush2.msra.mxu0 0.0
    %1237 = vmatprep.subr.mxu0 0.0
    %1238 = vmatpush2.msra.mxu0 0.0
    %1239 = vmatprep.subr.mxu0 0.0
    %1240 = vmatpush2.msra.mxu0 0.0
    %1241 = vmatprep.subr.mxu0 0.0
    %1242 = vmatpush2.msra.mxu0 0.0
    %1243 = vmatprep.subr.mxu0 0.0
    %1244 = vmatpush2.msra.mxu0 0.0
    %1245 = vmatprep.subr.mxu0 0.0
    %1246 = vmatpush2.msra.mxu0 0.0
    %1247 = vmatprep.subr.mxu0 0.0
    %1248 = vmatpush2.msra.mxu0 0.0
    %1249 = vmatprep.subr.mxu0 0.0
    %1250 = vmatpush2.msra.mxu0 0.0
    %1251 = vmatprep.subr.mxu0 0.0
    %1252 = vmatpush2.msra.mxu0 0.0
    %1253 = vmatprep.subr.mxu0 0.0
    %1254 = vmatpush2.msra.mxu0 0.0
    %1255 = vmatprep.subr.mxu0 0.0
    %1256 = vmatpush2.msra.mxu0 0.0
    %1257 = vmatprep.subr.mxu0 0.0
    %1258 = vmatpush2.msra.mxu0 0.0
    %1259 = vmatprep.subr.mxu0 0.0
    %1260 = vmatpush2.msra.mxu0 0.0
    %1261 = vmatprep.subr.mxu0 0.0
    %1262 = vmatpush2.msra.mxu0 0.0
    %1263 = vmatprep.mubr.f32.mxu0 0.0
    %1264 = vmatmul.mubr.f32.gmra.mxu0 %v1197
    %v1265 = vpop.f32.mrf.mxu0
    %v1266 = vadd.f32 %v1194, %v1265
    %v1267 = vpop.f32.mrf.mxu0
    %1268 = vdwg.mxu0
    %v1269 = vmax.f32 %v1266, 0.0
    %v1270 = vld [vmem:[%s14] sm:$0xff]
    %v1271 = vld [vmem:[%s14 + $0x8] sm:$0xff]
    %v1272 = vld [vmem:[%s14 + $0x10] sm:$0xff]
    %v1273 = vld [vmem:[%s14 + $0x18] sm:$0xff]
    %v1274 = vld [vmem:[#allocation13] sm:$0x1]
    %v1276 = vlaneseq
    %v1277 = vshrl.u32 %v1276, 7
    %v1278 = vsub.s32 0, %v1277
    %v1279 = vrot.slane %v1274, %v1278
    %v1282 = vsel %vm239, %v1269, 0
    %1284 = vmatprep.subr.mxu0 0.0
    %1285 = vmatpush1.msra.mxu0 0.0
    %1286 = vmatprep.subr.mxu0 0.0
    %1287 = vmatpush1.msra.mxu0 0.0
    %1288 = vmatprep.subr.mxu0 0.0
    %1289 = vmatpush1.msra.mxu0 0.0
    %1290 = vmatprep.subr.mxu0 0.0
    %1291 = vmatpush1.msra.mxu0 0.0
    %1292 = vmatprep.subr.mxu0 0.0
    %1293 = vmatpush1.msra.mxu0 0.0
    %1294 = vmatprep.subr.mxu0 0.0
    %1295 = vmatpush1.msra.mxu0 0.0
    %1296 = vmatprep.subr.mxu0 0.0
    %1297 = vmatpush1.msra.mxu0 0.0
    %1298 = vmatprep.subr.mxu0 0.0
    %1299 = vmatpush1.msra.mxu0 0.0
    %1300 = vmatprep.subr.mxu0 0.0
    %1301 = vmatpush1.msra.mxu0 0.0
    %1302 = vmatprep.subr.mxu0 0.0
    %1303 = vmatpush1.msra.mxu0 0.0
    %1304 = vmatprep.subr.mxu0 0.0
    %1305 = vmatpush1.msra.mxu0 0.0
    %1306 = vmatprep.subr.mxu0 0.0
    %1307 = vmatpush1.msra.mxu0 0.0
    %1308 = vmatprep.subr.mxu0 0.0
    %1309 = vmatpush1.msra.mxu0 %v1273
    %1310 = vmatprep.subr.mxu0 0.0
    %1311 = vmatpush1.msra.mxu0 %v1272
    %1312 = vmatprep.subr.mxu0 0.0
    %1313 = vmatpush1.msra.mxu0 %v1271
    %1314 = vmatprep.subr.mxu0 0.0
    %1315 = vmatpush1.msra.mxu0 %v1270
    %1316 = vmatprep.subr.mxu0 0.0
    %1317 = vmatpush2.msra.mxu0 0.0
    %1318 = vmatprep.subr.mxu0 0.0
    %1319 = vmatpush2.msra.mxu0 0.0
    %1320 = vmatprep.subr.mxu0 0.0
    %1321 = vmatpush2.msra.mxu0 0.0
    %1322 = vmatprep.subr.mxu0 0.0
    %1323 = vmatpush2.msra.mxu0 0.0
    %1324 = vmatprep.subr.mxu0 0.0
    %1325 = vmatpush2.msra.mxu0 0.0
    %1326 = vmatprep.subr.mxu0 0.0
    %1327 = vmatpush2.msra.mxu0 0.0
    %1328 = vmatprep.subr.mxu0 0.0
    %1329 = vmatpush2.msra.mxu0 0.0
    %1330 = vmatprep.subr.mxu0 0.0
    %1331 = vmatpush2.msra.mxu0 0.0
    %1332 = vmatprep.subr.mxu0 0.0
    %1333 = vmatpush2.msra.mxu0 0.0
    %1334 = vmatprep.subr.mxu0 0.0
    %1335 = vmatpush2.msra.mxu0 0.0
    %1336 = vmatprep.subr.mxu0 0.0
    %1337 = vmatpush2.msra.mxu0 0.0
    %1338 = vmatprep.subr.mxu0 0.0
    %1339 = vmatpush2.msra.mxu0 0.0
    %1340 = vmatprep.subr.mxu0 0.0
    %1341 = vmatpush2.msra.mxu0 0.0
    %1342 = vmatprep.subr.mxu0 0.0
    %1343 = vmatpush2.msra.mxu0 0.0
    %1344 = vmatprep.subr.mxu0 0.0
    %1345 = vmatpush2.msra.mxu0 0.0
    %1346 = vmatprep.subr.mxu0 0.0
    %1347 = vmatpush2.msra.mxu0 0.0
    %1348 = vmatprep.mubr.f32.mxu0 0.0
    %1349 = vmatmul.mubr.f32.gmra.mxu0 %v1282
    %v1350 = vpop.f32.mrf.mxu0
    %v1351 = vadd.f32 %v1279, %v1350
    %v1352 = vpop.f32.mrf.mxu0
    %1353 = vdwg.mxu0
    %vm1354 = vcmask 19456
    %v1355 = vsel %vm1354, %v1351, -inf
    %1356 = vmax.xlane.f32.xlu0 %v1355
    %v1357 = vpop.xlane.xlu0 %1356
    %v1358 = vsub.f32 %v1351, %v1357
    %v1359 = vmul.f32 %v1358, 1.442695
    %v1360 = vpow.pop %v1359
    %v1361 = vsel %vm1354, %v1360, 0.0
    %1362 = vadd.xlane.f32.xlu0 %v1361
    %v1363 = vpop.xlane.xlu0 %1362
    %v1364 = vlog2.pop %v1363
    %v1365 = vmul.f32 %v1364, 0.6931472
    %v1366 = vsub.f32 %v1358, %v1365
    %1367 = vst.msk [vmem:[%s16] sm:$0xf] %vm1354, %v1366
    // Predicated region
    $region94: #{augment.1} parent=1 // pred_check
      _
    $region95: #{augment.1} parent=1 // pred_check_branch
      %1369 = sbr.rel (0) target = $region97
    $region96: #{augment.1} parent=1 // pred_region
      _
    $region97: #{augment.1} parent=1 // pred_fallthru
      _
    // Predicated region
    $region98: #{augment.1} parent=1 // pred_check
      _
    $region99: #{augment.1} parent=1 // pred_check_branch
      %1371 = sbr.rel (0) target = $region101
    $region100: #{augment.1} parent=1 // pred_region
      _
    $region101: #{augment.1} parent=1 // pred_fallthru
      _
    %1372 = vsyncpa [#allocation4], 1
    %1373 = vsyncpa [#allocation6], 1
    %1374 = vsyncpa [#allocation9], 1
    %1375 = vsyncpa [#allocation12], 1

</llo_original>
